<compile_context>
chip_gen: v7x
topology: tpu7x:2x2x1
jax: 0.10.0
libtpu: 0.0.40
codegen_flags: <defaults>
</compile_context>

<pallas_src>
import jax
import jax.numpy as jnp
from jax import lax
from jax.experimental import pallas as pl
from jax.experimental.pallas import tpu as pltpu

HIDDEN = 64
OUTPUT = 10
OUT_PAD = 128        # lane-dense padded logits width
KSIZE = 7
STRIDE = 3
OH = OW = 8          # (28 - 7) // 3 + 1
NPOS = OH * OW       # 64 conv output positions
KDIM = NPOS * KSIZE * KSIZE   # 3136 = concatenated patch width per image
FDIM = NPOS * 4               # 256 = flattened conv feature width
MAX_TB = 256                  # batch tile (multiple of 8) once B grows


# ---------------------------------------------------------------------------
# Fused kernel: conv(as block-diag matmul) + bias + square + fc1 + relu + fc2
# ---------------------------------------------------------------------------
def convnet_kernel(p_ref, wblk_ref, bc_ref, w1_ref, b1_ref, w2_ref, b2_ref,
                   o_ref):
    # p_ref:    (TB, 3136)  per-image concatenated conv patches (s-major, tap-minor)
    # wblk_ref: (3136, 256) block-diagonal conv weight  kron(I_64, Wc)
    # bc_ref:   (1, 256)    conv bias tiled into (s*4 + c) order
    # w1_ref:   (256, H)    fc1 weight, rows permuted to (s*4 + c) order
    # b1_ref:   (1, H)
    # w2_ref:   (H, 128)    fc2 weight, output zero-padded 10 -> 128 lanes
    # b2_ref:   (1, 128)
    conv = jnp.dot(p_ref[...], wblk_ref[...],
                   preferred_element_type=jnp.float32) + bc_ref[...]
    feats = conv * conv                               # (TB, 256), stays in VMEM
    h = jnp.dot(feats, w1_ref[...],
                preferred_element_type=jnp.float32) + b1_ref[...]
    h = jnp.maximum(h, 0.0)
    o_ref[...] = jnp.dot(h, w2_ref[...],
                         preferred_element_type=jnp.float32) + b2_ref[...]


def convnet_forward(x, params):
    """x: (B, 1, 28, 28) float32 NCHW.  Returns (B, 10) logits."""
    wc, bc, w1, b1, w2, b2 = params
    B = x.shape[0]

    # ---- glue: patch extraction as ONE fused op ---------------------------
    # (B, OH, OW, 49) with tap order (kh, kw); flatten to (B, 3136) where the
    # column index is s*49 + k, s = oh*8 + ow.
    p = lax.conv_general_dilated_patches(
        x, (KSIZE, KSIZE), (STRIDE, STRIDE), "VALID",
        dimension_numbers=("NCHW", "OIHW", "NHWC"))
    patches = p.reshape(B, KDIM)

    # ---- static weight prep (trace-time, all tiny) ------------------------
    # conv weight (4,1,7,7) -> (49,4); expand to block-diagonal (3136, 256):
    #   w_blk[s*49+k, s'*4+c] = (s == s') * Wc[k, c]
    wc_mat = wc.reshape(4, KSIZE * KSIZE).T                       # (49, 4)
    w_blk = jnp.kron(jnp.eye(NPOS, dtype=jnp.float32), wc_mat)    # (3136, 256)
    bc256 = jnp.tile(bc, NPOS).reshape(1, FDIM)                   # bc256[0, s*4+c]=bc[c]

    # fc1: PyTorch flatten order is (c, oh, ow) -> row index c*64+s of w1.T.
    # Permute rows so row (s*4 + c) of w1_perm == row (c*64 + s) of w1.T.
    w1_perm = (w1.T.reshape(4, NPOS, HIDDEN)
                   .transpose(1, 0, 2)
                   .reshape(FDIM, HIDDEN))                        # (256, H)
    b1_mat = b1.reshape(1, HIDDEN)

    # fc2: lane-pad the output 10 -> 128 so the only HBM store is dense.
    w2_pad = jnp.zeros((HIDDEN, OUT_PAD), jnp.float32).at[:, :OUTPUT].set(w2.T)
    b2_pad = jnp.zeros((1, OUT_PAD), jnp.float32).at[:, :OUTPUT].set(
        b2.reshape(1, OUTPUT))

    # ---- batch tiling ------------------------------------------------------
    if B <= MAX_TB:
        tb, b_pad = B, B                       # single tile; block == full dim
    else:
        tb = MAX_TB                            # multiple of 8
        b_pad = pl.cdiv(B, tb) * tb
        if b_pad != B:
            patches = jnp.pad(patches, ((0, b_pad - B), (0, 0)))
    nb = b_pad // tb

    logits_pad = pl.pallas_call(
        convnet_kernel,
        out_shape=jax.ShapeDtypeStruct((b_pad, OUT_PAD), jnp.float32),
        grid=(nb,),
        in_specs=[
            pl.BlockSpec((tb, KDIM), lambda i: (i, 0)),         # patches
            pl.BlockSpec((KDIM, FDIM), lambda i: (0, 0)),       # w_blk
            pl.BlockSpec((1, FDIM), lambda i: (0, 0)),          # bc256
            pl.BlockSpec((FDIM, HIDDEN), lambda i: (0, 0)),     # w1_perm
            pl.BlockSpec((1, HIDDEN), lambda i: (0, 0)),        # b1
            pl.BlockSpec((HIDDEN, OUT_PAD), lambda i: (0, 0)),  # w2_pad
            pl.BlockSpec((1, OUT_PAD), lambda i: (0, 0)),       # b2_pad
        ],
        out_specs=pl.BlockSpec((tb, OUT_PAD), lambda i: (i, 0)),
        compiler_params=pltpu.CompilerParams(
            dimension_semantics=("parallel",)),
    )(patches, w_blk, bc256, w1_perm, b1_mat, w2_pad, b2_pad)

    return logits_pad[:B, :OUTPUT]


def convnet_reference(x, params):
    """Pure-JAX reference matching the PyTorch forward exactly."""
    wc, bc, w1, b1, w2, b2 = params
    y = lax.conv_general_dilated(
        x, wc, window_strides=(STRIDE, STRIDE), padding="VALID",
        dimension_numbers=("NCHW", "OIHW", "NCHW"))
    y = y + bc.reshape(1, 4, 1, 1)
    y = y * y
    y = y.reshape(-1, 256)
    y = jnp.maximum(y @ w1.T + b1, 0.0)
    return y @ w2.T + b2


def init_params(key):
    k = jax.random.split(key, 6)
    wc = jax.random.normal(k[0], (4, 1, KSIZE, KSIZE), jnp.float32) * 0.1
    bc = jax.random.normal(k[1], (4,), jnp.float32) * 0.1
    w1 = jax.random.normal(k[2], (HIDDEN, 256), jnp.float32) * 0.05
    b1 = jax.random.normal(k[3], (HIDDEN,), jnp.float32) * 0.05
    w2 = jax.random.normal(k[4], (OUTPUT, HIDDEN), jnp.float32) * 0.05
    b2 = jax.random.normal(k[5], (OUTPUT,), jnp.float32) * 0.05
    return wc, bc, w1, b1, w2, b2


if __name__ == "__main__":
    key = jax.random.PRNGKey(0)
    pkey, xkey = jax.random.split(key)
    params = init_params(pkey)

    B = 2
    x = jax.random.normal(xkey, (B, 1, 28, 28), jnp.float32)

    out = jax.jit(convnet_forward)(x, params)
    out = jax.block_until_ready(out)

    ref = convnet_reference(x, params)
    assert out.shape == (B, OUTPUT)
    assert jnp.allclose(out, ref, atol=1e-4, rtol=1e-4), "mismatch vs reference"

    print("KERNEL_OK")
</pallas_src>

<mosaic_0001>
module attributes {stable_mosaic.version = 11 : i64} {
  func.func @convnet_kernel(%arg0: i32, %arg1: memref<2x3136xf32, #tpu.memory_space<vmem>>, %arg2: memref<3136x256xf32, #tpu.memory_space<vmem>>, %arg3: memref<1x256xf32, #tpu.memory_space<vmem>>, %arg4: memref<256x64xf32, #tpu.memory_space<vmem>>, %arg5: memref<1x64xf32, #tpu.memory_space<vmem>>, %arg6: memref<64x128xf32, #tpu.memory_space<vmem>>, %arg7: memref<1x128xf32, #tpu.memory_space<vmem>>, %arg8: memref<2x128xf32, #tpu.memory_space<vmem>>) attributes {dimension_semantics = [#tpu.dimension_semantics<parallel>], iteration_bounds = array<i64: 1>, scalar_prefetch = 0 : i64, scratch_operands = 0 : i64, tpu.core_type = #tpu.core_type<tc>, window_params = [{transform_indices = @transform_0, window_bounds = array<i64: 2, 3136>}, {pipeline_mode = #tpu.pipeline_mode<synchronous>, transform_indices = @transform_1, window_bounds = array<i64: 3136, 256>}, {pipeline_mode = #tpu.pipeline_mode<synchronous>, transform_indices = @transform_2, window_bounds = array<i64: 1, 256>}, {pipeline_mode = #tpu.pipeline_mode<synchronous>, transform_indices = @transform_3, window_bounds = array<i64: 256, 64>}, {pipeline_mode = #tpu.pipeline_mode<synchronous>, transform_indices = @transform_4, window_bounds = array<i64: 1, 64>}, {pipeline_mode = #tpu.pipeline_mode<synchronous>, transform_indices = @transform_5, window_bounds = array<i64: 64, 128>}, {pipeline_mode = #tpu.pipeline_mode<synchronous>, transform_indices = @transform_6, window_bounds = array<i64: 1, 128>}, {transform_indices = @transform_7, window_bounds = array<i64: 2, 128>}]} {
    %c0 = arith.constant 0 : index
    %c0_0 = arith.constant 0 : index
    %0 = vector.load %arg1[%c0, %c0_0] : memref<2x3136xf32, #tpu.memory_space<vmem>>, vector<2x3136xf32>
    %c0_1 = arith.constant 0 : index
    %c0_2 = arith.constant 0 : index
    %1 = vector.load %arg2[%c0_1, %c0_2] : memref<3136x256xf32, #tpu.memory_space<vmem>>, vector<3136x256xf32>
    %cst = arith.constant dense<0.000000e+00> : vector<2x256xf32>
    %2 = tpu.matmul %0, %1, %cst {dimension_numbers = #tpu.dot_dimension_numbers<[1], [0], [0], [1], [0, 0, 1, 1], [], []>} : vector<2x3136xf32>, vector<3136x256xf32>, vector<2x256xf32> -> vector<2x256xf32>
    %c0_3 = arith.constant 0 : index
    %c0_4 = arith.constant 0 : index
    %3 = vector.load %arg3[%c0_3, %c0_4] : memref<1x256xf32, #tpu.memory_space<vmem>>, vector<1x256xf32>
    %4 = vector.broadcast %3 : vector<1x256xf32> to vector<2x256xf32>
    %5 = arith.addf %2, %4 : vector<2x256xf32>
    %6 = arith.mulf %5, %5 : vector<2x256xf32>
    %c0_5 = arith.constant 0 : index
    %c0_6 = arith.constant 0 : index
    %7 = vector.load %arg4[%c0_5, %c0_6] : memref<256x64xf32, #tpu.memory_space<vmem>>, vector<256x64xf32>
    %cst_7 = arith.constant dense<0.000000e+00> : vector<2x64xf32>
    %8 = tpu.matmul %6, %7, %cst_7 {dimension_numbers = #tpu.dot_dimension_numbers<[1], [0], [0], [1], [0, 0, 1, 1], [], []>} : vector<2x256xf32>, vector<256x64xf32>, vector<2x64xf32> -> vector<2x64xf32>
    %c0_8 = arith.constant 0 : index
    %c0_9 = arith.constant 0 : index
    %9 = vector.load %arg5[%c0_8, %c0_9] : memref<1x64xf32, #tpu.memory_space<vmem>>, vector<1x64xf32>
    %10 = vector.broadcast %9 : vector<1x64xf32> to vector<2x64xf32>
    %11 = arith.addf %8, %10 : vector<2x64xf32>
    %cst_10 = arith.constant 0.000000e+00 : f32
    %12 = vector.broadcast %cst_10 : f32 to vector<2x64xf32>
    %13 = arith.maximumf %11, %12 : vector<2x64xf32>
    %c0_11 = arith.constant 0 : index
    %c0_12 = arith.constant 0 : index
    %14 = vector.load %arg6[%c0_11, %c0_12] : memref<64x128xf32, #tpu.memory_space<vmem>>, vector<64x128xf32>
    %cst_13 = arith.constant dense<0.000000e+00> : vector<2x128xf32>
    %15 = tpu.matmul %13, %14, %cst_13 {dimension_numbers = #tpu.dot_dimension_numbers<[1], [0], [0], [1], [0, 0, 1, 1], [], []>} : vector<2x64xf32>, vector<64x128xf32>, vector<2x128xf32> -> vector<2x128xf32>
    %c0_14 = arith.constant 0 : index
    %c0_15 = arith.constant 0 : index
    %16 = vector.load %arg7[%c0_14, %c0_15] : memref<1x128xf32, #tpu.memory_space<vmem>>, vector<1x128xf32>
    %17 = vector.broadcast %16 : vector<1x128xf32> to vector<2x128xf32>
    %18 = arith.addf %15, %17 : vector<2x128xf32>
    %c0_16 = arith.constant 0 : index
    %c0_17 = arith.constant 0 : index
    %19 = vector.load %arg8[%c0_16, %c0_17] : memref<2x128xf32, #tpu.memory_space<vmem>>, vector<2x128xf32>
    tpu.vector_store %arg8[%c0_16, %c0_17], %18 {strides = array<i32>} : memref<2x128xf32, #tpu.memory_space<vmem>>, vector<2x128xf32>,
    return
  }
  func.func @transform_0(%arg0: i32) -> (i32, i32) {
    %c0_i32 = arith.constant 0 : i32
    %c0_i32_0 = arith.constant 0 : i32
    return %arg0, %c0_i32 : i32, i32
  }
  func.func @transform_1(%arg0: i32) -> (i32, i32) {
    %c0_i32 = arith.constant 0 : i32
    %c0_i32_0 = arith.constant 0 : i32
    %c0_i32_1 = arith.constant 0 : i32
    return %c0_i32, %c0_i32_0 : i32, i32
  }
  func.func @transform_2(%arg0: i32) -> (i32, i32) {
    %c0_i32 = arith.constant 0 : i32
    %c0_i32_0 = arith.constant 0 : i32
    %c0_i32_1 = arith.constant 0 : i32
    return %c0_i32, %c0_i32_0 : i32, i32
  }
  func.func @transform_3(%arg0: i32) -> (i32, i32) {
    %c0_i32 = arith.constant 0 : i32
    %c0_i32_0 = arith.constant 0 : i32
    %c0_i32_1 = arith.constant 0 : i32
    return %c0_i32, %c0_i32_0 : i32, i32
  }
  func.func @transform_4(%arg0: i32) -> (i32, i32) {
    %c0_i32 = arith.constant 0 : i32
    %c0_i32_0 = arith.constant 0 : i32
    %c0_i32_1 = arith.constant 0 : i32
    return %c0_i32, %c0_i32_0 : i32, i32
  }
  func.func @transform_5(%arg0: i32) -> (i32, i32) {
    %c0_i32 = arith.constant 0 : i32
    %c0_i32_0 = arith.constant 0 : i32
    %c0_i32_1 = arith.constant 0 : i32
    return %c0_i32, %c0_i32_0 : i32, i32
  }
  func.func @transform_6(%arg0: i32) -> (i32, i32) {
    %c0_i32 = arith.constant 0 : i32
    %c0_i32_0 = arith.constant 0 : i32
    %c0_i32_1 = arith.constant 0 : i32
    return %c0_i32, %c0_i32_0 : i32, i32
  }
  func.func @transform_7(%arg0: i32) -> (i32, i32) {
    %c0_i32 = arith.constant 0 : i32
    %c0_i32_0 = arith.constant 0 : i32
    return %arg0, %c0_i32 : i32, i32
  }
}

</mosaic_0001>

<llo_original>
// kernel: tile.8
$region0: #{tile.8}
  #allocation0 [shape = 's32[1]{0}', space=sflag, size = 0x4, scoped, tag = 'scoped memory for tile.8']
  %s0 = inlined_call_operand.vmem [shape: f32[4], index: 0, kind: input, shape index: {}]
  %s1 = inlined_call_operand.vmem [shape: f32[64,4], index: 1, kind: output, shape index: {}]
  // Predicated region
  $region2: #{tile.8} parent=0 // pred_check
    _
  $region3: #{tile.8} parent=0 // pred_check_branch
    %3 = sbr.rel (0) target = $region5
  $region4: #{tile.8} parent=0 // pred_region
    _
  $region5: #{tile.8} parent=0 // pred_fallthru
    _
  %v4 = vld [vmem:[%s0] ss:$0 sm:$0xff]
  %5 = vst [vmem:[%s1] sm:$0xff] %v4
  %s6 = scalar_lea.vmem %s1, 8
  %7 = vst [vmem:[%s6] sm:$0xff] %v4
  %s8 = scalar_lea.vmem %s1, 16
  %9 = vst [vmem:[%s8] sm:$0xff] %v4
  %s10 = scalar_lea.vmem %s1, 24
  %11 = vst [vmem:[%s10] sm:$0xff] %v4
  %s12 = scalar_lea.vmem %s1, 32
  %13 = vst [vmem:[%s12] sm:$0xff] %v4
  %s14 = scalar_lea.vmem %s1, 40
  %15 = vst [vmem:[%s14] sm:$0xff] %v4
  %s16 = scalar_lea.vmem %s1, 48
  %17 = vst [vmem:[%s16] sm:$0xff] %v4
  %s18 = scalar_lea.vmem %s1, 56
  %19 = vst [vmem:[%s18] sm:$0xff] %v4

// kernel: tile.9
$region0: #{tile.9}
  %s0 = inlined_call_operand.vmem [shape: f32[64,4], index: 0, kind: input, shape index: {}]
  %s1 = inlined_call_operand.vmem [shape: f32[1,256], index: 1, kind: output, shape index: {}]
  $region1: #{tile.9} parent=0
    #allocation0 [shape = 'u8[8192]{0}', space=vmem, size = 0x2000, scoped, tag = 'scoped mem for output reshape']
    %v2 = vld [vmem:[%s0] sm:$0x1]
    %s3 = scalar_lea.vmem %s0, 31
    %v4 = vld [vmem:[%s3] sm:$0x2]
    %vm5 = vcmask 1041409
    %v6 = vsel %vm5, %v4, %v2
    %vm7 = vcmask 31744
    %8 = vst.msk [vmem:[#allocation0] ss:$8 sm:$0x3] %vm7, %v6
    %s9 = scalar_lea.vmem %s0, 31
    %v10 = vld [vmem:[%s9] sm:$0x1]
    %s11 = scalar_lea.vmem %s0, 62
    %v12 = vld [vmem:[%s11] sm:$0x2]
    %vm13 = vcmask 1041409
    %v14 = vsel %vm13, %v12, %v10
    %15 = vrot.lane.b32.xlu0 %v14, 124
    %v16 = vpop.permute.xlu0 %15
    %vm17 = vcmask 1048544
    %18 = vst.msk [vmem:[#allocation0] ss:$8 sm:$0x3] %vm17, %v16
    %s19 = scalar_lea.vmem %s0, 30
    %v20 = vld [vmem:[%s19] sm:$0x1]
    %s21 = scalar_lea.vmem %s0, 61
    %v22 = vld [vmem:[%s21] sm:$0x2]
    %vm23 = vcmask 1041409
    %v24 = vsel %vm23, %v22, %v20
    %25 = vrot.lane.b32.xlu0 %v24, 120
    %v26 = vpop.permute.xlu0 %25
    %vm27 = vcmask 1015744
    %28 = vst.msk [vmem:[#allocation0] ss:$8 sm:$0x3] %vm27, %v26
    %s29 = scalar_lea.vmem %s0, 29
    %v30 = vld [vmem:[%s29] sm:$0x1]
    %s31 = scalar_lea.vmem %s0, 60
    %v32 = vld [vmem:[%s31] sm:$0x2]
    %vm33 = vcmask 1041409
    %v34 = vsel %vm33, %v32, %v30
    %35 = vrot.lane.b32.xlu0 %v34, 116
    %v36 = vpop.permute.xlu0 %35
    %vm37 = vcmask 982944
    %38 = vst.msk [vmem:[#allocation0] ss:$8 sm:$0x3] %vm37, %v36
    %s39 = scalar_lea.vmem %s0, 28
    %v40 = vld [vmem:[%s39] sm:$0x1]
    %s41 = scalar_lea.vmem %s0, 59
    %v42 = vld [vmem:[%s41] sm:$0x2]
    %vm43 = vcmask 1041409
    %v44 = vsel %vm43, %v42, %v40
    %45 = vrot.lane.b32.xlu0 %v44, 112
    %v46 = vpop.permute.xlu0 %45
    %vm47 = vcmask 950144
    %48 = vst.msk [vmem:[#allocation0] ss:$8 sm:$0x3] %vm47, %v46
    %s49 = scalar_lea.vmem %s0, 27
    %v50 = vld [vmem:[%s49] sm:$0x1]
    %s51 = scalar_lea.vmem %s0, 58
    %v52 = vld [vmem:[%s51] sm:$0x2]
    %vm53 = vcmask 1041409
    %v54 = vsel %vm53, %v52, %v50
    %55 = vrot.lane.b32.xlu0 %v54, 108
    %v56 = vpop.permute.xlu0 %55
    %vm57 = vcmask 917344
    %58 = vst.msk [vmem:[#allocation0] ss:$8 sm:$0x3] %vm57, %v56
    %s59 = scalar_lea.vmem %s0, 26
    %v60 = vld [vmem:[%s59] sm:$0x1]
    %s61 = scalar_lea.vmem %s0, 57
    %v62 = vld [vmem:[%s61] sm:$0x2]
    %vm63 = vcmask 1041409
    %v64 = vsel %vm63, %v62, %v60
    %65 = vrot.lane.b32.xlu0 %v64, 104
    %v66 = vpop.permute.xlu0 %65
    %vm67 = vcmask 884544
    %68 = vst.msk [vmem:[#allocation0] ss:$8 sm:$0x3] %vm67, %v66
    %s69 = scalar_lea.vmem %s0, 25
    %v70 = vld [vmem:[%s69] sm:$0x1]
    %s71 = scalar_lea.vmem %s0, 56
    %v72 = vld [vmem:[%s71] sm:$0x2]
    %vm73 = vcmask 1041409
    %v74 = vsel %vm73, %v72, %v70
    %75 = vrot.lane.b32.xlu0 %v74, 100
    %v76 = vpop.permute.xlu0 %75
    %vm77 = vcmask 851744
    %78 = vst.msk [vmem:[#allocation0] ss:$8 sm:$0x3] %vm77, %v76
    %s79 = scalar_lea.vmem %s0, 24
    %v80 = vld [vmem:[%s79] sm:$0x1]
    %s81 = scalar_lea.vmem %s0, 55
    %v82 = vld [vmem:[%s81] sm:$0x2]
    %vm83 = vcmask 1041409
    %v84 = vsel %vm83, %v82, %v80
    %85 = vrot.lane.b32.xlu0 %v84, 96
    %v86 = vpop.permute.xlu0 %85
    %vm87 = vcmask 818944
    %88 = vst.msk [vmem:[#allocation0] ss:$8 sm:$0x3] %vm87, %v86
    %s89 = scalar_lea.vmem %s0, 23
    %v90 = vld [vmem:[%s89] sm:$0x1]
    %s91 = scalar_lea.vmem %s0, 54
    %v92 = vld [vmem:[%s91] sm:$0x2]
    %vm93 = vcmask 1041409
    %v94 = vsel %vm93, %v92, %v90
    %95 = vrot.lane.b32.xlu0 %v94, 92
    %v96 = vpop.permute.xlu0 %95
    %vm97 = vcmask 786144
    %98 = vst.msk [vmem:[#allocation0] ss:$8 sm:$0x3] %vm97, %v96
    %s99 = scalar_lea.vmem %s0, 22
    %v100 = vld [vmem:[%s99] sm:$0x1]
    %s101 = scalar_lea.vmem %s0, 53
    %v102 = vld [vmem:[%s101] sm:$0x2]
    %vm103 = vcmask 1041409
    %v104 = vsel %vm103, %v102, %v100
    %105 = vrot.lane.b32.xlu0 %v104, 88
    %v106 = vpop.permute.xlu0 %105
    %vm107 = vcmask 753344
    %108 = vst.msk [vmem:[#allocation0] ss:$8 sm:$0x3] %vm107, %v106
    %s109 = scalar_lea.vmem %s0, 21
    %v110 = vld [vmem:[%s109] sm:$0x1]
    %s111 = scalar_lea.vmem %s0, 52
    %v112 = vld [vmem:[%s111] sm:$0x2]
    %vm113 = vcmask 1041409
    %v114 = vsel %vm113, %v112, %v110
    %115 = vrot.lane.b32.xlu0 %v114, 84
    %v116 = vpop.permute.xlu0 %115
    %vm117 = vcmask 720544
    %118 = vst.msk [vmem:[#allocation0] ss:$8 sm:$0x3] %vm117, %v116
    %s119 = scalar_lea.vmem %s0, 20
    %v120 = vld [vmem:[%s119] sm:$0x1]
    %s121 = scalar_lea.vmem %s0, 51
    %v122 = vld [vmem:[%s121] sm:$0x2]
    %vm123 = vcmask 1041409
    %v124 = vsel %vm123, %v122, %v120
    %125 = vrot.lane.b32.xlu0 %v124, 80
    %v126 = vpop.permute.xlu0 %125
    %vm127 = vcmask 687744
    %128 = vst.msk [vmem:[#allocation0] ss:$8 sm:$0x3] %vm127, %v126
    %s129 = scalar_lea.vmem %s0, 19
    %v130 = vld [vmem:[%s129] sm:$0x1]
    %s131 = scalar_lea.vmem %s0, 50
    %v132 = vld [vmem:[%s131] sm:$0x2]
    %vm133 = vcmask 1041409
    %v134 = vsel %vm133, %v132, %v130
    %135 = vrot.lane.b32.xlu0 %v134, 76
    %v136 = vpop.permute.xlu0 %135
    %vm137 = vcmask 654944
    %138 = vst.msk [vmem:[#allocation0] ss:$8 sm:$0x3] %vm137, %v136
    %s139 = scalar_lea.vmem %s0, 18
    %v140 = vld [vmem:[%s139] sm:$0x1]
    %s141 = scalar_lea.vmem %s0, 49
    %v142 = vld [vmem:[%s141] sm:$0x2]
    %vm143 = vcmask 1041409
    %v144 = vsel %vm143, %v142, %v140
    %145 = vrot.lane.b32.xlu0 %v144, 72
    %v146 = vpop.permute.xlu0 %145
    %vm147 = vcmask 622144
    %148 = vst.msk [vmem:[#allocation0] ss:$8 sm:$0x3] %vm147, %v146
    %s149 = scalar_lea.vmem %s0, 17
    %v150 = vld [vmem:[%s149] sm:$0x1]
    %s151 = scalar_lea.vmem %s0, 48
    %v152 = vld [vmem:[%s151] sm:$0x2]
    %vm153 = vcmask 1041409
    %v154 = vsel %vm153, %v152, %v150
    %155 = vrot.lane.b32.xlu0 %v154, 68
    %v156 = vpop.permute.xlu0 %155
    %vm157 = vcmask 589344
    %158 = vst.msk [vmem:[#allocation0] ss:$8 sm:$0x3] %vm157, %v156
    %s159 = scalar_lea.vmem %s0, 16
    %v160 = vld [vmem:[%s159] sm:$0x1]
    %s161 = scalar_lea.vmem %s0, 47
    %v162 = vld [vmem:[%s161] sm:$0x2]
    %vm163 = vcmask 1041409
    %v164 = vsel %vm163, %v162, %v160
    %165 = vrot.lane.b32.xlu0 %v164, 64
    %v166 = vpop.permute.xlu0 %165
    %vm167 = vcmask 556544
    %168 = vst.msk [vmem:[#allocation0] ss:$8 sm:$0x3] %vm167, %v166
    %s169 = scalar_lea.vmem %s0, 15
    %v170 = vld [vmem:[%s169] sm:$0x1]
    %s171 = scalar_lea.vmem %s0, 46
    %v172 = vld [vmem:[%s171] sm:$0x2]
    %vm173 = vcmask 1041409
    %v174 = vsel %vm173, %v172, %v170
    %175 = vrot.lane.b32.xlu0 %v174, 60
    %v176 = vpop.permute.xlu0 %175
    %vm177 = vcmask 523744
    %178 = vst.msk [vmem:[#allocation0] ss:$8 sm:$0x3] %vm177, %v176
    %s179 = scalar_lea.vmem %s0, 14
    %v180 = vld [vmem:[%s179] sm:$0x1]
    %s181 = scalar_lea.vmem %s0, 45
    %v182 = vld [vmem:[%s181] sm:$0x2]
    %vm183 = vcmask 1041409
    %v184 = vsel %vm183, %v182, %v180
    %185 = vrot.lane.b32.xlu0 %v184, 56
    %v186 = vpop.permute.xlu0 %185
    %vm187 = vcmask 490944
    %188 = vst.msk [vmem:[#allocation0] ss:$8 sm:$0x3] %vm187, %v186
    %s189 = scalar_lea.vmem %s0, 13
    %v190 = vld [vmem:[%s189] sm:$0x1]
    %s191 = scalar_lea.vmem %s0, 44
    %v192 = vld [vmem:[%s191] sm:$0x2]
    %vm193 = vcmask 1041409
    %v194 = vsel %vm193, %v192, %v190
    %195 = vrot.lane.b32.xlu0 %v194, 52
    %v196 = vpop.permute.xlu0 %195
    %vm197 = vcmask 458144
    %198 = vst.msk [vmem:[#allocation0] ss:$8 sm:$0x3] %vm197, %v196
    %s199 = scalar_lea.vmem %s0, 12
    %v200 = vld [vmem:[%s199] sm:$0x1]
    %s201 = scalar_lea.vmem %s0, 43
    %v202 = vld [vmem:[%s201] sm:$0x2]
    %vm203 = vcmask 1041409
    %v204 = vsel %vm203, %v202, %v200
    %205 = vrot.lane.b32.xlu0 %v204, 48
    %v206 = vpop.permute.xlu0 %205
    %vm207 = vcmask 425344
    %208 = vst.msk [vmem:[#allocation0] ss:$8 sm:$0x3] %vm207, %v206
    %s209 = scalar_lea.vmem %s0, 11
    %v210 = vld [vmem:[%s209] sm:$0x1]
    %s211 = scalar_lea.vmem %s0, 42
    %v212 = vld [vmem:[%s211] sm:$0x2]
    %vm213 = vcmask 1041409
    %v214 = vsel %vm213, %v212, %v210
    %215 = vrot.lane.b32.xlu0 %v214, 44
    %v216 = vpop.permute.xlu0 %215
    %vm217 = vcmask 392544
    %218 = vst.msk [vmem:[#allocation0] ss:$8 sm:$0x3] %vm217, %v216
    %s219 = scalar_lea.vmem %s0, 10
    %v220 = vld [vmem:[%s219] sm:$0x1]
    %s221 = scalar_lea.vmem %s0, 41
    %v222 = vld [vmem:[%s221] sm:$0x2]
    %vm223 = vcmask 1041409
    %v224 = vsel %vm223, %v222, %v220
    %225 = vrot.lane.b32.xlu0 %v224, 40
    %v226 = vpop.permute.xlu0 %225
    %vm227 = vcmask 359744
    %228 = vst.msk [vmem:[#allocation0] ss:$8 sm:$0x3] %vm227, %v226
    %s229 = scalar_lea.vmem %s0, 9
    %v230 = vld [vmem:[%s229] sm:$0x1]
    %s231 = scalar_lea.vmem %s0, 40
    %v232 = vld [vmem:[%s231] sm:$0x2]
    %vm233 = vcmask 1041409
    %v234 = vsel %vm233, %v232, %v230
    %235 = vrot.lane.b32.xlu0 %v234, 36
    %v236 = vpop.permute.xlu0 %235
    %vm237 = vcmask 326944
    %238 = vst.msk [vmem:[#allocation0] ss:$8 sm:$0x3] %vm237, %v236
    %s239 = scalar_lea.vmem %s0, 8
    %v240 = vld [vmem:[%s239] sm:$0x1]
    %s241 = scalar_lea.vmem %s0, 39
    %v242 = vld [vmem:[%s241] sm:$0x2]
    %vm243 = vcmask 1041409
    %v244 = vsel %vm243, %v242, %v240
    %245 = vrot.lane.b32.xlu0 %v244, 32
    %v246 = vpop.permute.xlu0 %245
    %vm247 = vcmask 294144
    %248 = vst.msk [vmem:[#allocation0] ss:$8 sm:$0x3] %vm247, %v246
    %s249 = scalar_lea.vmem %s0, 7
    %v250 = vld [vmem:[%s249] sm:$0x1]
    %s251 = scalar_lea.vmem %s0, 38
    %v252 = vld [vmem:[%s251] sm:$0x2]
    %vm253 = vcmask 1041409
    %v254 = vsel %vm253, %v252, %v250
    %255 = vrot.lane.b32.xlu0 %v254, 28
    %v256 = vpop.permute.xlu0 %255
    %vm257 = vcmask 261344
    %258 = vst.msk [vmem:[#allocation0] ss:$8 sm:$0x3] %vm257, %v256
    %s259 = scalar_lea.vmem %s0, 6
    %v260 = vld [vmem:[%s259] sm:$0x1]
    %s261 = scalar_lea.vmem %s0, 37
    %v262 = vld [vmem:[%s261] sm:$0x2]
    %vm263 = vcmask 1041409
    %v264 = vsel %vm263, %v262, %v260
    %265 = vrot.lane.b32.xlu0 %v264, 24
    %v266 = vpop.permute.xlu0 %265
    %vm267 = vcmask 228544
    %268 = vst.msk [vmem:[#allocation0] ss:$8 sm:$0x3] %vm267, %v266
    %s269 = scalar_lea.vmem %s0, 5
    %v270 = vld [vmem:[%s269] sm:$0x1]
    %s271 = scalar_lea.vmem %s0, 36
    %v272 = vld [vmem:[%s271] sm:$0x2]
    %vm273 = vcmask 1041409
    %v274 = vsel %vm273, %v272, %v270
    %275 = vrot.lane.b32.xlu0 %v274, 20
    %v276 = vpop.permute.xlu0 %275
    %vm277 = vcmask 195744
    %278 = vst.msk [vmem:[#allocation0] ss:$8 sm:$0x3] %vm277, %v276
    %s279 = scalar_lea.vmem %s0, 4
    %v280 = vld [vmem:[%s279] sm:$0x1]
    %s281 = scalar_lea.vmem %s0, 35
    %v282 = vld [vmem:[%s281] sm:$0x2]
    %vm283 = vcmask 1041409
    %v284 = vsel %vm283, %v282, %v280
    %285 = vrot.lane.b32.xlu0 %v284, 16
    %v286 = vpop.permute.xlu0 %285
    %vm287 = vcmask 162944
    %288 = vst.msk [vmem:[#allocation0] ss:$8 sm:$0x3] %vm287, %v286
    %s289 = scalar_lea.vmem %s0, 3
    %v290 = vld [vmem:[%s289] sm:$0x1]
    %s291 = scalar_lea.vmem %s0, 34
    %v292 = vld [vmem:[%s291] sm:$0x2]
    %vm293 = vcmask 1041409
    %v294 = vsel %vm293, %v292, %v290
    %295 = vrot.lane.b32.xlu0 %v294, 12
    %v296 = vpop.permute.xlu0 %295
    %vm297 = vcmask 130144
    %298 = vst.msk [vmem:[#allocation0] ss:$8 sm:$0x3] %vm297, %v296
    %s299 = scalar_lea.vmem %s0, 2
    %v300 = vld [vmem:[%s299] sm:$0x1]
    %s301 = scalar_lea.vmem %s0, 33
    %v302 = vld [vmem:[%s301] sm:$0x2]
    %vm303 = vcmask 1041409
    %v304 = vsel %vm303, %v302, %v300
    %305 = vrot.lane.b32.xlu0 %v304, 8
    %v306 = vpop.permute.xlu0 %305
    %vm307 = vcmask 97344
    %308 = vst.msk [vmem:[#allocation0] ss:$8 sm:$0x3] %vm307, %v306
    %s309 = scalar_lea.vmem %s0, 1
    %v310 = vld [vmem:[%s309] sm:$0x1]
    %s311 = scalar_lea.vmem %s0, 32
    %v312 = vld [vmem:[%s311] sm:$0x2]
    %vm313 = vcmask 1041409
    %v314 = vsel %vm313, %v312, %v310
    %315 = vrot.lane.b32.xlu0 %v314, 4
    %v316 = vpop.permute.xlu0 %315
    %vm317 = vcmask 64544
    %318 = vst.msk [vmem:[#allocation0] ss:$8 sm:$0x3] %vm317, %v316
    %s320 = sshllo.u32 0, 1
    %v322 = vld [vmem:[#allocation0] sm:%s320]
    %s323 = sshllo.u32 0, 1
    %324 = vst [vmem:[%s1] sm:%s323] %v322
    %s325 = scalar_lea.vmem [#allocation0], 8
    %v326 = vld [vmem:[%s325] sm:%s320]
    %s327 = sshllo.u32 0, 1
    %s328 = scalar_lea.vmem %s1, 1
    %329 = vst [vmem:[%s328] sm:%s327] %v326

// kernel: convnet_forward.1
$region0: #{convnet_forward.1}
  #allocation0 [shape = 'u32[]', space=smem, size = 0x4, offset = 0x4, fixed_abs, tag = 'smem constant byte address 0x4 - core index']
  #allocation1 [shape = 'u32[144,128]{1,0:T(1,128)}', space=vmem, size = 0x12000, scoped, tag = 'internal scratch']
  %s0 = inlined_call_operand.vmem [shape: f32[2,3136], index: 0, kind: input, shape index: {}]
  %s1 = inlined_call_operand.vmem [shape: f32[3136,256], index: 1, kind: input, shape index: {}]
  %s2 = inlined_call_operand.vmem [shape: f32[1,256], index: 2, kind: input, shape index: {}]
  %s3 = inlined_call_operand.vmem [shape: f32[256,64], index: 3, kind: input, shape index: {}]
  %s4 = inlined_call_operand.vmem [shape: f32[1,64], index: 4, kind: input, shape index: {}]
  %s5 = inlined_call_operand.vmem [shape: f32[64,128], index: 5, kind: input, shape index: {}]
  %s6 = inlined_call_operand.vmem [shape: f32[1,128], index: 6, kind: input, shape index: {}]
  %s7 = inlined_call_operand.hbm [shape: f32[2,128], index: 7, kind: output, shape index: {}]
  %s8 = sld [smem:[#allocation0]]
  $region38: #{convnet_forward.1} parent=0
    _
  %s10 = ssub.s32 1, %s8
  %s11 = scalar_select 0, %s10, %s8
  $region1: #{convnet_forward.1} parent=0
    #allocation2 [shape = 'u8[1024]{0}', space=vmem, size = 0x400, scoped, tag = 'output window, operand 0, single buffered']
    #allocation3 [shape = 's32[1]{0}', space=sflag, size = 0x4, scoped, tag = 'scoped memory for convnet_forward.1']
    %12 = vsyncpa [#allocation3], 0
    // Predicated region
    $region2: #{convnet_forward.1} parent=1 // pred_check
      _
    $region3: #{convnet_forward.1} parent=1 // pred_check_branch
      %14 = sbr.rel (0) target = $region5
    $region4: #{convnet_forward.1} parent=1 // pred_region
      _
    $region5: #{convnet_forward.1} parent=1 // pred_fallthru
      _
    // Predicated region
    $region6: #{convnet_forward.1} parent=1 // pred_check
      _
    $region7: #{convnet_forward.1} parent=1 // pred_check_branch
      %16 = sbr.rel (0) target = $region9
    $region8: #{convnet_forward.1} parent=1 // pred_region
      _
    $region9: #{convnet_forward.1} parent=1 // pred_fallthru
      _
    // Predicated region
    $region10: #{convnet_forward.1} parent=1 // pred_check
      _
    $region11: #{convnet_forward.1} parent=1 // pred_check_branch
      %18 = sbr.rel (0) target = $region13
    $region12: #{convnet_forward.1} parent=1 // pred_region
      _
    $region13: #{convnet_forward.1} parent=1 // pred_fallthru
      _
    // Predicated region
    $region14: #{convnet_forward.1} parent=1 // pred_check
      _
    $region15: #{convnet_forward.1} parent=1 // pred_check_branch
      %20 = sbr.rel (0) target = $region17
    $region16: #{convnet_forward.1} parent=1 // pred_region
      _
    $region17: #{convnet_forward.1} parent=1 // pred_fallthru
      _
    // Predicated region
    $region18: #{convnet_forward.1} parent=1 // pred_check
      _
    $region19: #{convnet_forward.1} parent=1 // pred_check_branch
      %22 = sbr.rel (0) target = $region21
    $region20: #{convnet_forward.1} parent=1 // pred_region
      _
    $region21: #{convnet_forward.1} parent=1 // pred_fallthru
      _
    // Predicated region
    $region22: #{convnet_forward.1} parent=1 // pred_check
      _
    $region23: #{convnet_forward.1} parent=1 // pred_check_branch
      %24 = sbr.rel (0) target = $region25
    $region24: #{convnet_forward.1} parent=1 // pred_region
      _
    $region25: #{convnet_forward.1} parent=1 // pred_fallthru
      _
    // Predicated region
    $region26: #{convnet_forward.1} parent=1 // pred_check
      _
    $region27: #{convnet_forward.1} parent=1 // pred_check_branch
      %26 = sbr.rel (0) target = $region29
    $region28: #{convnet_forward.1} parent=1 // pred_region
      _
    $region29: #{convnet_forward.1} parent=1 // pred_fallthru
      _
    %v27 = vld [vmem:[%s0] sm:$0xff]
    %v28 = vld [vmem:[%s0 + $0x8] sm:$0xff]
    %v29 = vld [vmem:[%s0 + $0x10] sm:$0xff]
    %v30 = vld [vmem:[%s0 + $0x18] sm:$0xff]
    %v31 = vld [vmem:[%s0 + $0x20] sm:$0xff]
    %v32 = vld [vmem:[%s0 + $0x28] sm:$0xff]
    %v33 = vld [vmem:[%s0 + $0x30] sm:$0x3]
    %v34 = vld [vmem:[%s1] sm:$0xff]
    %v35 = vld [vmem:[%s1 + $0x8] sm:$0xff]
    %v36 = vld [vmem:[%s1 + $0x10] sm:$0xff]
    %v37 = vld [vmem:[%s1 + $0x18] sm:$0xff]
    %v38 = vld [vmem:[%s1 + $0x20] sm:$0xff]
    %v39 = vld [vmem:[%s1 + $0x28] sm:$0xff]
    %v40 = vld [vmem:[%s1 + $0x30] sm:$0xff]
    %v41 = vld [vmem:[%s1 + $0x38] sm:$0xff]
    %v42 = vld [vmem:[%s1 + $0x40] sm:$0xff]
    %v43 = vld [vmem:[%s1 + $0x48] sm:$0xff]
    %v44 = vld [vmem:[%s1 + $0x50] sm:$0xff]
    %v45 = vld [vmem:[%s1 + $0x58] sm:$0xff]
    %v46 = vld [vmem:[%s1 + $0x60] sm:$0xff]
    %v47 = vld [vmem:[%s1 + $0x68] sm:$0xff]
    %v48 = vld [vmem:[%s1 + $0x70] sm:$0xff]
    %v49 = vld [vmem:[%s1 + $0x78] sm:$0xff]
    %v50 = vld [vmem:[%s1 + $0x80] sm:$0xff]
    %v51 = vld [vmem:[%s1 + $0x88] sm:$0xff]
    %v52 = vld [vmem:[%s1 + $0x90] sm:$0xff]
    %v53 = vld [vmem:[%s1 + $0x98] sm:$0xff]
    %v54 = vld [vmem:[%s1 + $0xa0] sm:$0xff]
    %v55 = vld [vmem:[%s1 + $0xa8] sm:$0xff]
    %v56 = vld [vmem:[%s1 + $0xb0] sm:$0xff]
    %v57 = vld [vmem:[%s1 + $0xb8] sm:$0xff]
    %v58 = vld [vmem:[%s1 + $0xc0] sm:$0xff]
    %v59 = vld [vmem:[%s1 + $0xc8] sm:$0xff]
    %v60 = vld [vmem:[%s1 + $0xd0] sm:$0xff]
    %v61 = vld [vmem:[%s1 + $0xd8] sm:$0xff]
    %v62 = vld [vmem:[%s1 + $0xe0] sm:$0xff]
    %v63 = vld [vmem:[%s1 + $0xe8] sm:$0xff]
    %v64 = vld [vmem:[%s1 + $0xf0] sm:$0xff]
    %v65 = vld [vmem:[%s1 + $0xf8] sm:$0xff]
    %v66 = vld [vmem:[%s1 + $0x100] sm:$0xff]
    %v67 = vld [vmem:[%s1 + $0x108] sm:$0xff]
    %v68 = vld [vmem:[%s1 + $0x110] sm:$0xff]
    %v69 = vld [vmem:[%s1 + $0x118] sm:$0xff]
    %v70 = vld [vmem:[%s1 + $0x120] sm:$0xff]
    %v71 = vld [vmem:[%s1 + $0x128] sm:$0xff]
    %v72 = vld [vmem:[%s1 + $0x130] sm:$0xff]
    %v73 = vld [vmem:[%s1 + $0x138] sm:$0xff]
    %v74 = vld [vmem:[%s1 + $0x140] sm:$0xff]
    %v75 = vld [vmem:[%s1 + $0x148] sm:$0xff]
    %v76 = vld [vmem:[%s1 + $0x150] sm:$0xff]
    %v77 = vld [vmem:[%s1 + $0x158] sm:$0xff]
    %v78 = vld [vmem:[%s1 + $0x160] sm:$0xff]
    %v79 = vld [vmem:[%s1 + $0x168] sm:$0xff]
    %v80 = vld [vmem:[%s1 + $0x170] sm:$0xff]
    %v81 = vld [vmem:[%s1 + $0x178] sm:$0xff]
    %v82 = vld [vmem:[%s1 + $0x180] sm:$0xff]
    %v83 = vld [vmem:[%s1 + $0x188] sm:$0xff]
    %v84 = vld [vmem:[%s1 + $0x190] sm:$0xff]
    %v85 = vld [vmem:[%s1 + $0x198] sm:$0xff]
    %v86 = vld [vmem:[%s1 + $0x1a0] sm:$0xff]
    %v87 = vld [vmem:[%s1 + $0x1a8] sm:$0xff]
    %v88 = vld [vmem:[%s1 + $0x1b0] sm:$0xff]
    %v89 = vld [vmem:[%s1 + $0x1b8] sm:$0xff]
    %v90 = vld [vmem:[%s1 + $0x1c0] sm:$0xff]
    %v91 = vld [vmem:[%s1 + $0x1c8] sm:$0xff]
    %v92 = vld [vmem:[%s1 + $0x1d0] sm:$0xff]
    %v93 = vld [vmem:[%s1 + $0x1d8] sm:$0xff]
    %v94 = vld [vmem:[%s1 + $0x1e0] sm:$0xff]
    %v95 = vld [vmem:[%s1 + $0x1e8] sm:$0xff]
    %v96 = vld [vmem:[%s1 + $0x1f0] sm:$0xff]
    %v97 = vld [vmem:[%s1 + $0x1f8] sm:$0xff]
    %v98 = vld [vmem:[%s1 + $0x200] sm:$0xff]
    %v99 = vld [vmem:[%s1 + $0x208] sm:$0xff]
    %v100 = vld [vmem:[%s1 + $0x210] sm:$0xff]
    %v101 = vld [vmem:[%s1 + $0x218] sm:$0xff]
    %v102 = vld [vmem:[%s1 + $0x220] sm:$0xff]
    %v103 = vld [vmem:[%s1 + $0x228] sm:$0xff]
    %v104 = vld [vmem:[%s1 + $0x230] sm:$0xff]
    %v105 = vld [vmem:[%s1 + $0x238] sm:$0xff]
    %v106 = vld [vmem:[%s1 + $0x240] sm:$0xff]
    %v107 = vld [vmem:[%s1 + $0x248] sm:$0xff]
    %v108 = vld [vmem:[%s1 + $0x250] sm:$0xff]
    %v109 = vld [vmem:[%s1 + $0x258] sm:$0xff]
    %v110 = vld [vmem:[%s1 + $0x260] sm:$0xff]
    %v111 = vld [vmem:[%s1 + $0x268] sm:$0xff]
    %v112 = vld [vmem:[%s1 + $0x270] sm:$0xff]
    %v113 = vld [vmem:[%s1 + $0x278] sm:$0xff]
    %v114 = vld [vmem:[%s1 + $0x280] sm:$0xff]
    %v115 = vld [vmem:[%s1 + $0x288] sm:$0xff]
    %v116 = vld [vmem:[%s1 + $0x290] sm:$0xff]
    %v117 = vld [vmem:[%s1 + $0x298] sm:$0xff]
    %v118 = vld [vmem:[%s1 + $0x2a0] sm:$0xff]
    %v119 = vld [vmem:[%s1 + $0x2a8] sm:$0xff]
    %v120 = vld [vmem:[%s1 + $0x2b0] sm:$0xff]
    %v121 = vld [vmem:[%s1 + $0x2b8] sm:$0xff]
    %v122 = vld [vmem:[%s1 + $0x2c0] sm:$0xff]
    %v123 = vld [vmem:[%s1 + $0x2c8] sm:$0xff]
    %v124 = vld [vmem:[%s1 + $0x2d0] sm:$0xff]
    %v125 = vld [vmem:[%s1 + $0x2d8] sm:$0xff]
    %v126 = vld [vmem:[%s1 + $0x2e0] sm:$0xff]
    %v127 = vld [vmem:[%s1 + $0x2e8] sm:$0xff]
    %v128 = vld [vmem:[%s1 + $0x2f0] sm:$0xff]
    %v129 = vld [vmem:[%s1 + $0x2f8] sm:$0xff]
    %v130 = vld [vmem:[%s1 + $0x300] sm:$0xff]
    %v131 = vld [vmem:[%s1 + $0x308] sm:$0xff]
    %v132 = vld [vmem:[%s1 + $0x310] sm:$0xff]
    %v133 = vld [vmem:[%s1 + $0x318] sm:$0xff]
    %v134 = vld [vmem:[%s1 + $0x320] sm:$0xff]
    %v135 = vld [vmem:[%s1 + $0x328] sm:$0xff]
    %v136 = vld [vmem:[%s1 + $0x330] sm:$0xff]
    %v137 = vld [vmem:[%s1 + $0x338] sm:$0xff]
    %v138 = vld [vmem:[%s1 + $0x340] sm:$0xff]
    %v139 = vld [vmem:[%s1 + $0x348] sm:$0xff]
    %v140 = vld [vmem:[%s1 + $0x350] sm:$0xff]
    %v141 = vld [vmem:[%s1 + $0x358] sm:$0xff]
    %v142 = vld [vmem:[%s1 + $0x360] sm:$0xff]
    %v143 = vld [vmem:[%s1 + $0x368] sm:$0xff]
    %v144 = vld [vmem:[%s1 + $0x370] sm:$0xff]
    %v145 = vld [vmem:[%s1 + $0x378] sm:$0xff]
    %v146 = vld [vmem:[%s1 + $0x380] sm:$0xff]
    %v147 = vld [vmem:[%s1 + $0x388] sm:$0xff]
    %v148 = vld [vmem:[%s1 + $0x390] sm:$0xff]
    %v149 = vld [vmem:[%s1 + $0x398] sm:$0xff]
    %v150 = vld [vmem:[%s1 + $0x3a0] sm:$0xff]
    %v151 = vld [vmem:[%s1 + $0x3a8] sm:$0xff]
    %v152 = vld [vmem:[%s1 + $0x3b0] sm:$0xff]
    %v153 = vld [vmem:[%s1 + $0x3b8] sm:$0xff]
    %v154 = vld [vmem:[%s1 + $0x3c0] sm:$0xff]
    %v155 = vld [vmem:[%s1 + $0x3c8] sm:$0xff]
    %v156 = vld [vmem:[%s1 + $0x3d0] sm:$0xff]
    %v157 = vld [vmem:[%s1 + $0x3d8] sm:$0xff]
    %v158 = vld [vmem:[%s1 + $0x3e0] sm:$0xff]
    %v159 = vld [vmem:[%s1 + $0x3e8] sm:$0xff]
    %v160 = vld [vmem:[%s1 + $0x3f0] sm:$0xff]
    %v161 = vld [vmem:[%s1 + $0x3f8] sm:$0xff]
    %v162 = vld [vmem:[%s1 + $0x400] sm:$0xff]
    %v163 = vld [vmem:[%s1 + $0x408] sm:$0xff]
    %v164 = vld [vmem:[%s1 + $0x410] sm:$0xff]
    %v165 = vld [vmem:[%s1 + $0x418] sm:$0xff]
    %v166 = vld [vmem:[%s1 + $0x420] sm:$0xff]
    %v167 = vld [vmem:[%s1 + $0x428] sm:$0xff]
    %v168 = vld [vmem:[%s1 + $0x430] sm:$0xff]
    %v169 = vld [vmem:[%s1 + $0x438] sm:$0xff]
    %v170 = vld [vmem:[%s1 + $0x440] sm:$0xff]
    %v171 = vld [vmem:[%s1 + $0x448] sm:$0xff]
    %v172 = vld [vmem:[%s1 + $0x450] sm:$0xff]
    %v173 = vld [vmem:[%s1 + $0x458] sm:$0xff]
    %v174 = vld [vmem:[%s1 + $0x460] sm:$0xff]
    %v175 = vld [vmem:[%s1 + $0x468] sm:$0xff]
    %v176 = vld [vmem:[%s1 + $0x470] sm:$0xff]
    %v177 = vld [vmem:[%s1 + $0x478] sm:$0xff]
    %v178 = vld [vmem:[%s1 + $0x480] sm:$0xff]
    %v179 = vld [vmem:[%s1 + $0x488] sm:$0xff]
    %v180 = vld [vmem:[%s1 + $0x490] sm:$0xff]
    %v181 = vld [vmem:[%s1 + $0x498] sm:$0xff]
    %v182 = vld [vmem:[%s1 + $0x4a0] sm:$0xff]
    %v183 = vld [vmem:[%s1 + $0x4a8] sm:$0xff]
    %v184 = vld [vmem:[%s1 + $0x4b0] sm:$0xff]
    %v185 = vld [vmem:[%s1 + $0x4b8] sm:$0xff]
    %v186 = vld [vmem:[%s1 + $0x4c0] sm:$0xff]
    %v187 = vld [vmem:[%s1 + $0x4c8] sm:$0xff]
    %v188 = vld [vmem:[%s1 + $0x4d0] sm:$0xff]
    %v189 = vld [vmem:[%s1 + $0x4d8] sm:$0xff]
    %v190 = vld [vmem:[%s1 + $0x4e0] sm:$0xff]
    %v191 = vld [vmem:[%s1 + $0x4e8] sm:$0xff]
    %v192 = vld [vmem:[%s1 + $0x4f0] sm:$0xff]
    %v193 = vld [vmem:[%s1 + $0x4f8] sm:$0xff]
    %v194 = vld [vmem:[%s1 + $0x500] sm:$0xff]
    %v195 = vld [vmem:[%s1 + $0x508] sm:$0xff]
    %v196 = vld [vmem:[%s1 + $0x510] sm:$0xff]
    %v197 = vld [vmem:[%s1 + $0x518] sm:$0xff]
    %v198 = vld [vmem:[%s1 + $0x520] sm:$0xff]
    %v199 = vld [vmem:[%s1 + $0x528] sm:$0xff]
    %v200 = vld [vmem:[%s1 + $0x530] sm:$0xff]
    %v201 = vld [vmem:[%s1 + $0x538] sm:$0xff]
    %v202 = vld [vmem:[%s1 + $0x540] sm:$0xff]
    %v203 = vld [vmem:[%s1 + $0x548] sm:$0xff]
    %v204 = vld [vmem:[%s1 + $0x550] sm:$0xff]
    %v205 = vld [vmem:[%s1 + $0x558] sm:$0xff]
    %v206 = vld [vmem:[%s1 + $0x560] sm:$0xff]
    %v207 = vld [vmem:[%s1 + $0x568] sm:$0xff]
    %v208 = vld [vmem:[%s1 + $0x570] sm:$0xff]
    %v209 = vld [vmem:[%s1 + $0x578] sm:$0xff]
    %v210 = vld [vmem:[%s1 + $0x580] sm:$0xff]
    %v211 = vld [vmem:[%s1 + $0x588] sm:$0xff]
    %v212 = vld [vmem:[%s1 + $0x590] sm:$0xff]
    %v213 = vld [vmem:[%s1 + $0x598] sm:$0xff]
    %v214 = vld [vmem:[%s1 + $0x5a0] sm:$0xff]
    %v215 = vld [vmem:[%s1 + $0x5a8] sm:$0xff]
    %v216 = vld [vmem:[%s1 + $0x5b0] sm:$0xff]
    %v217 = vld [vmem:[%s1 + $0x5b8] sm:$0xff]
    %v218 = vld [vmem:[%s1 + $0x5c0] sm:$0xff]
    %v219 = vld [vmem:[%s1 + $0x5c8] sm:$0xff]
    %v220 = vld [vmem:[%s1 + $0x5d0] sm:$0xff]
    %v221 = vld [vmem:[%s1 + $0x5d8] sm:$0xff]
    %v222 = vld [vmem:[%s1 + $0x5e0] sm:$0xff]
    %v223 = vld [vmem:[%s1 + $0x5e8] sm:$0xff]
    %v224 = vld [vmem:[%s1 + $0x5f0] sm:$0xff]
    %v225 = vld [vmem:[%s1 + $0x5f8] sm:$0xff]
    %v226 = vld [vmem:[%s1 + $0x600] sm:$0xff]
    %v227 = vld [vmem:[%s1 + $0x608] sm:$0xff]
    %v228 = vld [vmem:[%s1 + $0x610] sm:$0xff]
    %v229 = vld [vmem:[%s1 + $0x618] sm:$0xff]
    %v230 = vld [vmem:[%s1 + $0x620] sm:$0xff]
    %v231 = vld [vmem:[%s1 + $0x628] sm:$0xff]
    %v232 = vld [vmem:[%s1 + $0x630] sm:$0xff]
    %v233 = vld [vmem:[%s1 + $0x638] sm:$0xff]
    %v234 = vld [vmem:[%s1 + $0x640] sm:$0xff]
    %v235 = vld [vmem:[%s1 + $0x648] sm:$0xff]
    %v236 = vld [vmem:[%s1 + $0x650] sm:$0xff]
    %v237 = vld [vmem:[%s1 + $0x658] sm:$0xff]
    %v238 = vld [vmem:[%s1 + $0x660] sm:$0xff]
    %v239 = vld [vmem:[%s1 + $0x668] sm:$0xff]
    %v240 = vld [vmem:[%s1 + $0x670] sm:$0xff]
    %v241 = vld [vmem:[%s1 + $0x678] sm:$0xff]
    %v242 = vld [vmem:[%s1 + $0x680] sm:$0xff]
    %v243 = vld [vmem:[%s1 + $0x688] sm:$0xff]
    %v244 = vld [vmem:[%s1 + $0x690] sm:$0xff]
    %v245 = vld [vmem:[%s1 + $0x698] sm:$0xff]
    %v246 = vld [vmem:[%s1 + $0x6a0] sm:$0xff]
    %v247 = vld [vmem:[%s1 + $0x6a8] sm:$0xff]
    %v248 = vld [vmem:[%s1 + $0x6b0] sm:$0xff]
    %v249 = vld [vmem:[%s1 + $0x6b8] sm:$0xff]
    %v250 = vld [vmem:[%s1 + $0x6c0] sm:$0xff]
    %v251 = vld [vmem:[%s1 + $0x6c8] sm:$0xff]
    %v252 = vld [vmem:[%s1 + $0x6d0] sm:$0xff]
    %v253 = vld [vmem:[%s1 + $0x6d8] sm:$0xff]
    %v254 = vld [vmem:[%s1 + $0x6e0] sm:$0xff]
    %v255 = vld [vmem:[%s1 + $0x6e8] sm:$0xff]
    %v256 = vld [vmem:[%s1 + $0x6f0] sm:$0xff]
    %v257 = vld [vmem:[%s1 + $0x6f8] sm:$0xff]
    %v258 = vld [vmem:[%s1 + $0x700] sm:$0xff]
    %v259 = vld [vmem:[%s1 + $0x708] sm:$0xff]
    %v260 = vld [vmem:[%s1 + $0x710] sm:$0xff]
    %v261 = vld [vmem:[%s1 + $0x718] sm:$0xff]
    %v262 = vld [vmem:[%s1 + $0x720] sm:$0xff]
    %v263 = vld [vmem:[%s1 + $0x728] sm:$0xff]
    %v264 = vld [vmem:[%s1 + $0x730] sm:$0xff]
    %v265 = vld [vmem:[%s1 + $0x738] sm:$0xff]
    %v266 = vld [vmem:[%s1 + $0x740] sm:$0xff]
    %v267 = vld [vmem:[%s1 + $0x748] sm:$0xff]
    %v268 = vld [vmem:[%s1 + $0x750] sm:$0xff]
    %v269 = vld [vmem:[%s1 + $0x758] sm:$0xff]
    %v270 = vld [vmem:[%s1 + $0x760] sm:$0xff]
    %v271 = vld [vmem:[%s1 + $0x768] sm:$0xff]
    %v272 = vld [vmem:[%s1 + $0x770] sm:$0xff]
    %v273 = vld [vmem:[%s1 + $0x778] sm:$0xff]
    %v274 = vld [vmem:[%s1 + $0x780] sm:$0xff]
    %v275 = vld [vmem:[%s1 + $0x788] sm:$0xff]
    %v276 = vld [vmem:[%s1 + $0x790] sm:$0xff]
    %v277 = vld [vmem:[%s1 + $0x798] sm:$0xff]
    %v278 = vld [vmem:[%s1 + $0x7a0] sm:$0xff]
    %v279 = vld [vmem:[%s1 + $0x7a8] sm:$0xff]
    %v280 = vld [vmem:[%s1 + $0x7b0] sm:$0xff]
    %v281 = vld [vmem:[%s1 + $0x7b8] sm:$0xff]
    %v282 = vld [vmem:[%s1 + $0x7c0] sm:$0xff]
    %v283 = vld [vmem:[%s1 + $0x7c8] sm:$0xff]
    %v284 = vld [vmem:[%s1 + $0x7d0] sm:$0xff]
    %v285 = vld [vmem:[%s1 + $0x7d8] sm:$0xff]
    %v286 = vld [vmem:[%s1 + $0x7e0] sm:$0xff]
    %v287 = vld [vmem:[%s1 + $0x7e8] sm:$0xff]
    %v288 = vld [vmem:[%s1 + $0x7f0] sm:$0xff]
    %v289 = vld [vmem:[%s1 + $0x7f8] sm:$0xff]
    %v290 = vld [vmem:[%s1 + $0x800] sm:$0xff]
    %v291 = vld [vmem:[%s1 + $0x808] sm:$0xff]
    %v292 = vld [vmem:[%s1 + $0x810] sm:$0xff]
    %v293 = vld [vmem:[%s1 + $0x818] sm:$0xff]
    %v294 = vld [vmem:[%s1 + $0x820] sm:$0xff]
    %v295 = vld [vmem:[%s1 + $0x828] sm:$0xff]
    %v296 = vld [vmem:[%s1 + $0x830] sm:$0xff]
    %v297 = vld [vmem:[%s1 + $0x838] sm:$0xff]
    %v298 = vld [vmem:[%s1 + $0x840] sm:$0xff]
    %v299 = vld [vmem:[%s1 + $0x848] sm:$0xff]
    %v300 = vld [vmem:[%s1 + $0x850] sm:$0xff]
    %v301 = vld [vmem:[%s1 + $0x858] sm:$0xff]
    %v302 = vld [vmem:[%s1 + $0x860] sm:$0xff]
    %v303 = vld [vmem:[%s1 + $0x868] sm:$0xff]
    %v304 = vld [vmem:[%s1 + $0x870] sm:$0xff]
    %v305 = vld [vmem:[%s1 + $0x878] sm:$0xff]
    %v306 = vld [vmem:[%s1 + $0x880] sm:$0xff]
    %v307 = vld [vmem:[%s1 + $0x888] sm:$0xff]
    %v308 = vld [vmem:[%s1 + $0x890] sm:$0xff]
    %v309 = vld [vmem:[%s1 + $0x898] sm:$0xff]
    %v310 = vld [vmem:[%s1 + $0x8a0] sm:$0xff]
    %v311 = vld [vmem:[%s1 + $0x8a8] sm:$0xff]
    %v312 = vld [vmem:[%s1 + $0x8b0] sm:$0xff]
    %v313 = vld [vmem:[%s1 + $0x8b8] sm:$0xff]
    %v314 = vld [vmem:[%s1 + $0x8c0] sm:$0xff]
    %v315 = vld [vmem:[%s1 + $0x8c8] sm:$0xff]
    %v316 = vld [vmem:[%s1 + $0x8d0] sm:$0xff]
    %v317 = vld [vmem:[%s1 + $0x8d8] sm:$0xff]
    %v318 = vld [vmem:[%s1 + $0x8e0] sm:$0xff]
    %v319 = vld [vmem:[%s1 + $0x8e8] sm:$0xff]
    %v320 = vld [vmem:[%s1 + $0x8f0] sm:$0xff]
    %v321 = vld [vmem:[%s1 + $0x8f8] sm:$0xff]
    %v322 = vld [vmem:[%s1 + $0x900] sm:$0xff]
    %v323 = vld [vmem:[%s1 + $0x908] sm:$0xff]
    %v324 = vld [vmem:[%s1 + $0x910] sm:$0xff]
    %v325 = vld [vmem:[%s1 + $0x918] sm:$0xff]
    %v326 = vld [vmem:[%s1 + $0x920] sm:$0xff]
    %v327 = vld [vmem:[%s1 + $0x928] sm:$0xff]
    %v328 = vld [vmem:[%s1 + $0x930] sm:$0xff]
    %v329 = vld [vmem:[%s1 + $0x938] sm:$0xff]
    %v330 = vld [vmem:[%s1 + $0x940] sm:$0xff]
    %v331 = vld [vmem:[%s1 + $0x948] sm:$0xff]
    %v332 = vld [vmem:[%s1 + $0x950] sm:$0xff]
    %v333 = vld [vmem:[%s1 + $0x958] sm:$0xff]
    %v334 = vld [vmem:[%s1 + $0x960] sm:$0xff]
    %v335 = vld [vmem:[%s1 + $0x968] sm:$0xff]
    %v336 = vld [vmem:[%s1 + $0x970] sm:$0xff]
    %v337 = vld [vmem:[%s1 + $0x978] sm:$0xff]
    %v338 = vld [vmem:[%s1 + $0x980] sm:$0xff]
    %v339 = vld [vmem:[%s1 + $0x988] sm:$0xff]
    %v340 = vld [vmem:[%s1 + $0x990] sm:$0xff]
    %v341 = vld [vmem:[%s1 + $0x998] sm:$0xff]
    %v342 = vld [vmem:[%s1 + $0x9a0] sm:$0xff]
    %v343 = vld [vmem:[%s1 + $0x9a8] sm:$0xff]
    %v344 = vld [vmem:[%s1 + $0x9b0] sm:$0xff]
    %v345 = vld [vmem:[%s1 + $0x9b8] sm:$0xff]
    %v346 = vld [vmem:[%s1 + $0x9c0] sm:$0xff]
    %v347 = vld [vmem:[%s1 + $0x9c8] sm:$0xff]
    %v348 = vld [vmem:[%s1 + $0x9d0] sm:$0xff]
    %v349 = vld [vmem:[%s1 + $0x9d8] sm:$0xff]
    %v350 = vld [vmem:[%s1 + $0x9e0] sm:$0xff]
    %v351 = vld [vmem:[%s1 + $0x9e8] sm:$0xff]
    %v352 = vld [vmem:[%s1 + $0x9f0] sm:$0xff]
    %v353 = vld [vmem:[%s1 + $0x9f8] sm:$0xff]
    %v354 = vld [vmem:[%s1 + $0xa00] sm:$0xff]
    %v355 = vld [vmem:[%s1 + $0xa08] sm:$0xff]
    %v356 = vld [vmem:[%s1 + $0xa10] sm:$0xff]
    %v357 = vld [vmem:[%s1 + $0xa18] sm:$0xff]
    %v358 = vld [vmem:[%s1 + $0xa20] sm:$0xff]
    %v359 = vld [vmem:[%s1 + $0xa28] sm:$0xff]
    %v360 = vld [vmem:[%s1 + $0xa30] sm:$0xff]
    %v361 = vld [vmem:[%s1 + $0xa38] sm:$0xff]
    %v362 = vld [vmem:[%s1 + $0xa40] sm:$0xff]
    %v363 = vld [vmem:[%s1 + $0xa48] sm:$0xff]
    %v364 = vld [vmem:[%s1 + $0xa50] sm:$0xff]
    %v365 = vld [vmem:[%s1 + $0xa58] sm:$0xff]
    %v366 = vld [vmem:[%s1 + $0xa60] sm:$0xff]
    %v367 = vld [vmem:[%s1 + $0xa68] sm:$0xff]
    %v368 = vld [vmem:[%s1 + $0xa70] sm:$0xff]
    %v369 = vld [vmem:[%s1 + $0xa78] sm:$0xff]
    %v370 = vld [vmem:[%s1 + $0xa80] sm:$0xff]
    %v371 = vld [vmem:[%s1 + $0xa88] sm:$0xff]
    %v372 = vld [vmem:[%s1 + $0xa90] sm:$0xff]
    %v373 = vld [vmem:[%s1 + $0xa98] sm:$0xff]
    %v374 = vld [vmem:[%s1 + $0xaa0] sm:$0xff]
    %v375 = vld [vmem:[%s1 + $0xaa8] sm:$0xff]
    %v376 = vld [vmem:[%s1 + $0xab0] sm:$0xff]
    %v377 = vld [vmem:[%s1 + $0xab8] sm:$0xff]
    %v378 = vld [vmem:[%s1 + $0xac0] sm:$0xff]
    %v379 = vld [vmem:[%s1 + $0xac8] sm:$0xff]
    %v380 = vld [vmem:[%s1 + $0xad0] sm:$0xff]
    %v381 = vld [vmem:[%s1 + $0xad8] sm:$0xff]
    %v382 = vld [vmem:[%s1 + $0xae0] sm:$0xff]
    %v383 = vld [vmem:[%s1 + $0xae8] sm:$0xff]
    %v384 = vld [vmem:[%s1 + $0xaf0] sm:$0xff]
    %v385 = vld [vmem:[%s1 + $0xaf8] sm:$0xff]
    %v386 = vld [vmem:[%s1 + $0xb00] sm:$0xff]
    %v387 = vld [vmem:[%s1 + $0xb08] sm:$0xff]
    %v388 = vld [vmem:[%s1 + $0xb10] sm:$0xff]
    %v389 = vld [vmem:[%s1 + $0xb18] sm:$0xff]
    %v390 = vld [vmem:[%s1 + $0xb20] sm:$0xff]
    %v391 = vld [vmem:[%s1 + $0xb28] sm:$0xff]
    %v392 = vld [vmem:[%s1 + $0xb30] sm:$0xff]
    %v393 = vld [vmem:[%s1 + $0xb38] sm:$0xff]
    %v394 = vld [vmem:[%s1 + $0xb40] sm:$0xff]
    %v395 = vld [vmem:[%s1 + $0xb48] sm:$0xff]
    %v396 = vld [vmem:[%s1 + $0xb50] sm:$0xff]
    %v397 = vld [vmem:[%s1 + $0xb58] sm:$0xff]
    %v398 = vld [vmem:[%s1 + $0xb60] sm:$0xff]
    %v399 = vld [vmem:[%s1 + $0xb68] sm:$0xff]
    %v400 = vld [vmem:[%s1 + $0xb70] sm:$0xff]
    %v401 = vld [vmem:[%s1 + $0xb78] sm:$0xff]
    %v402 = vld [vmem:[%s1 + $0xb80] sm:$0xff]
    %v403 = vld [vmem:[%s1 + $0xb88] sm:$0xff]
    %v404 = vld [vmem:[%s1 + $0xb90] sm:$0xff]
    %v405 = vld [vmem:[%s1 + $0xb98] sm:$0xff]
    %v406 = vld [vmem:[%s1 + $0xba0] sm:$0xff]
    %v407 = vld [vmem:[%s1 + $0xba8] sm:$0xff]
    %v408 = vld [vmem:[%s1 + $0xbb0] sm:$0xff]
    %v409 = vld [vmem:[%s1 + $0xbb8] sm:$0xff]
    %v410 = vld [vmem:[%s1 + $0xbc0] sm:$0xff]
    %v411 = vld [vmem:[%s1 + $0xbc8] sm:$0xff]
    %v412 = vld [vmem:[%s1 + $0xbd0] sm:$0xff]
    %v413 = vld [vmem:[%s1 + $0xbd8] sm:$0xff]
    %v414 = vld [vmem:[%s1 + $0xbe0] sm:$0xff]
    %v415 = vld [vmem:[%s1 + $0xbe8] sm:$0xff]
    %v416 = vld [vmem:[%s1 + $0xbf0] sm:$0xff]
    %v417 = vld [vmem:[%s1 + $0xbf8] sm:$0xff]
    %v418 = vld [vmem:[%s1 + $0xc00] sm:$0xff]
    %v419 = vld [vmem:[%s1 + $0xc08] sm:$0xff]
    %v420 = vld [vmem:[%s1 + $0xc10] sm:$0xff]
    %v421 = vld [vmem:[%s1 + $0xc18] sm:$0xff]
    %v422 = vld [vmem:[%s1 + $0xc20] sm:$0xff]
    %v423 = vld [vmem:[%s1 + $0xc28] sm:$0xff]
    %v424 = vld [vmem:[%s1 + $0xc30] sm:$0xff]
    %v425 = vld [vmem:[%s1 + $0xc38] sm:$0xff]
    %v426 = vld [vmem:[%s1 + $0xc40] sm:$0xff]
    %v427 = vld [vmem:[%s1 + $0xc48] sm:$0xff]
    %v428 = vld [vmem:[%s1 + $0xc50] sm:$0xff]
    %v429 = vld [vmem:[%s1 + $0xc58] sm:$0xff]
    %v430 = vld [vmem:[%s1 + $0xc60] sm:$0xff]
    %v431 = vld [vmem:[%s1 + $0xc68] sm:$0xff]
    %v432 = vld [vmem:[%s1 + $0xc70] sm:$0xff]
    %v433 = vld [vmem:[%s1 + $0xc78] sm:$0xff]
    %v434 = vld [vmem:[%s1 + $0xc80] sm:$0xff]
    %v435 = vld [vmem:[%s1 + $0xc88] sm:$0xff]
    %v436 = vld [vmem:[%s1 + $0xc90] sm:$0xff]
    %v437 = vld [vmem:[%s1 + $0xc98] sm:$0xff]
    %v438 = vld [vmem:[%s1 + $0xca0] sm:$0xff]
    %v439 = vld [vmem:[%s1 + $0xca8] sm:$0xff]
    %v440 = vld [vmem:[%s1 + $0xcb0] sm:$0xff]
    %v441 = vld [vmem:[%s1 + $0xcb8] sm:$0xff]
    %v442 = vld [vmem:[%s1 + $0xcc0] sm:$0xff]
    %v443 = vld [vmem:[%s1 + $0xcc8] sm:$0xff]
    %v444 = vld [vmem:[%s1 + $0xcd0] sm:$0xff]
    %v445 = vld [vmem:[%s1 + $0xcd8] sm:$0xff]
    %v446 = vld [vmem:[%s1 + $0xce0] sm:$0xff]
    %v447 = vld [vmem:[%s1 + $0xce8] sm:$0xff]
    %v448 = vld [vmem:[%s1 + $0xcf0] sm:$0xff]
    %v449 = vld [vmem:[%s1 + $0xcf8] sm:$0xff]
    %v450 = vld [vmem:[%s1 + $0xd00] sm:$0xff]
    %v451 = vld [vmem:[%s1 + $0xd08] sm:$0xff]
    %v452 = vld [vmem:[%s1 + $0xd10] sm:$0xff]
    %v453 = vld [vmem:[%s1 + $0xd18] sm:$0xff]
    %v454 = vld [vmem:[%s1 + $0xd20] sm:$0xff]
    %v455 = vld [vmem:[%s1 + $0xd28] sm:$0xff]
    %v456 = vld [vmem:[%s1 + $0xd30] sm:$0xff]
    %v457 = vld [vmem:[%s1 + $0xd38] sm:$0xff]
    %v458 = vld [vmem:[%s1 + $0xd40] sm:$0xff]
    %v459 = vld [vmem:[%s1 + $0xd48] sm:$0xff]
    %v460 = vld [vmem:[%s1 + $0xd50] sm:$0xff]
    %v461 = vld [vmem:[%s1 + $0xd58] sm:$0xff]
    %v462 = vld [vmem:[%s1 + $0xd60] sm:$0xff]
    %v463 = vld [vmem:[%s1 + $0xd68] sm:$0xff]
    %v464 = vld [vmem:[%s1 + $0xd70] sm:$0xff]
    %v465 = vld [vmem:[%s1 + $0xd78] sm:$0xff]
    %v466 = vld [vmem:[%s1 + $0xd80] sm:$0xff]
    %v467 = vld [vmem:[%s1 + $0xd88] sm:$0xff]
    %v468 = vld [vmem:[%s1 + $0xd90] sm:$0xff]
    %v469 = vld [vmem:[%s1 + $0xd98] sm:$0xff]
    %v470 = vld [vmem:[%s1 + $0xda0] sm:$0xff]
    %v471 = vld [vmem:[%s1 + $0xda8] sm:$0xff]
    %v472 = vld [vmem:[%s1 + $0xdb0] sm:$0xff]
    %v473 = vld [vmem:[%s1 + $0xdb8] sm:$0xff]
    %v474 = vld [vmem:[%s1 + $0xdc0] sm:$0xff]
    %v475 = vld [vmem:[%s1 + $0xdc8] sm:$0xff]
    %v476 = vld [vmem:[%s1 + $0xdd0] sm:$0xff]
    %v477 = vld [vmem:[%s1 + $0xdd8] sm:$0xff]
    %v478 = vld [vmem:[%s1 + $0xde0] sm:$0xff]
    %v479 = vld [vmem:[%s1 + $0xde8] sm:$0xff]
    %v480 = vld [vmem:[%s1 + $0xdf0] sm:$0xff]
    %v481 = vld [vmem:[%s1 + $0xdf8] sm:$0xff]
    %v482 = vld [vmem:[%s1 + $0xe00] sm:$0xff]
    %v483 = vld [vmem:[%s1 + $0xe08] sm:$0xff]
    %v484 = vld [vmem:[%s1 + $0xe10] sm:$0xff]
    %v485 = vld [vmem:[%s1 + $0xe18] sm:$0xff]
    %v486 = vld [vmem:[%s1 + $0xe20] sm:$0xff]
    %v487 = vld [vmem:[%s1 + $0xe28] sm:$0xff]
    %v488 = vld [vmem:[%s1 + $0xe30] sm:$0xff]
    %v489 = vld [vmem:[%s1 + $0xe38] sm:$0xff]
    %v490 = vld [vmem:[%s1 + $0xe40] sm:$0xff]
    %v491 = vld [vmem:[%s1 + $0xe48] sm:$0xff]
    %v492 = vld [vmem:[%s1 + $0xe50] sm:$0xff]
    %v493 = vld [vmem:[%s1 + $0xe58] sm:$0xff]
    %v494 = vld [vmem:[%s1 + $0xe60] sm:$0xff]
    %v495 = vld [vmem:[%s1 + $0xe68] sm:$0xff]
    %v496 = vld [vmem:[%s1 + $0xe70] sm:$0xff]
    %v497 = vld [vmem:[%s1 + $0xe78] sm:$0xff]
    %v498 = vld [vmem:[%s1 + $0xe80] sm:$0xff]
    %v499 = vld [vmem:[%s1 + $0xe88] sm:$0xff]
    %v500 = vld [vmem:[%s1 + $0xe90] sm:$0xff]
    %v501 = vld [vmem:[%s1 + $0xe98] sm:$0xff]
    %v502 = vld [vmem:[%s1 + $0xea0] sm:$0xff]
    %v503 = vld [vmem:[%s1 + $0xea8] sm:$0xff]
    %v504 = vld [vmem:[%s1 + $0xeb0] sm:$0xff]
    %v505 = vld [vmem:[%s1 + $0xeb8] sm:$0xff]
    %v506 = vld [vmem:[%s1 + $0xec0] sm:$0xff]
    %v507 = vld [vmem:[%s1 + $0xec8] sm:$0xff]
    %v508 = vld [vmem:[%s1 + $0xed0] sm:$0xff]
    %v509 = vld [vmem:[%s1 + $0xed8] sm:$0xff]
    %v510 = vld [vmem:[%s1 + $0xee0] sm:$0xff]
    %v511 = vld [vmem:[%s1 + $0xee8] sm:$0xff]
    %v512 = vld [vmem:[%s1 + $0xef0] sm:$0xff]
    %v513 = vld [vmem:[%s1 + $0xef8] sm:$0xff]
    %v514 = vld [vmem:[%s1 + $0xf00] sm:$0xff]
    %v515 = vld [vmem:[%s1 + $0xf08] sm:$0xff]
    %v516 = vld [vmem:[%s1 + $0xf10] sm:$0xff]
    %v517 = vld [vmem:[%s1 + $0xf18] sm:$0xff]
    %v518 = vld [vmem:[%s1 + $0xf20] sm:$0xff]
    %v519 = vld [vmem:[%s1 + $0xf28] sm:$0xff]
    %v520 = vld [vmem:[%s1 + $0xf30] sm:$0xff]
    %v521 = vld [vmem:[%s1 + $0xf38] sm:$0xff]
    %v522 = vld [vmem:[%s1 + $0xf40] sm:$0xff]
    %v523 = vld [vmem:[%s1 + $0xf48] sm:$0xff]
    %v524 = vld [vmem:[%s1 + $0xf50] sm:$0xff]
    %v525 = vld [vmem:[%s1 + $0xf58] sm:$0xff]
    %v526 = vld [vmem:[%s1 + $0xf60] sm:$0xff]
    %v527 = vld [vmem:[%s1 + $0xf68] sm:$0xff]
    %v528 = vld [vmem:[%s1 + $0xf70] sm:$0xff]
    %v529 = vld [vmem:[%s1 + $0xf78] sm:$0xff]
    %v530 = vld [vmem:[%s1 + $0xf80] sm:$0xff]
    %v531 = vld [vmem:[%s1 + $0xf88] sm:$0xff]
    %v532 = vld [vmem:[%s1 + $0xf90] sm:$0xff]
    %v533 = vld [vmem:[%s1 + $0xf98] sm:$0xff]
    %v534 = vld [vmem:[%s1 + $0xfa0] sm:$0xff]
    %v535 = vld [vmem:[%s1 + $0xfa8] sm:$0xff]
    %v536 = vld [vmem:[%s1 + $0xfb0] sm:$0xff]
    %v537 = vld [vmem:[%s1 + $0xfb8] sm:$0xff]
    %v538 = vld [vmem:[%s1 + $0xfc0] sm:$0xff]
    %v539 = vld [vmem:[%s1 + $0xfc8] sm:$0xff]
    %v540 = vld [vmem:[%s1 + $0xfd0] sm:$0xff]
    %v541 = vld [vmem:[%s1 + $0xfd8] sm:$0xff]
    %v542 = vld [vmem:[%s1 + $0xfe0] sm:$0xff]
    %v543 = vld [vmem:[%s1 + $0xfe8] sm:$0xff]
    %v544 = vld [vmem:[%s1 + $0xff0] sm:$0xff]
    %v545 = vld [vmem:[%s1 + $0xff8] sm:$0xff]
    %v546 = vld [vmem:[%s1 + $0x1000] sm:$0xff]
    %v547 = vld [vmem:[%s1 + $0x1008] sm:$0xff]
    %v548 = vld [vmem:[%s1 + $0x1010] sm:$0xff]
    %v549 = vld [vmem:[%s1 + $0x1018] sm:$0xff]
    %v550 = vld [vmem:[%s1 + $0x1020] sm:$0xff]
    %v551 = vld [vmem:[%s1 + $0x1028] sm:$0xff]
    %v552 = vld [vmem:[%s1 + $0x1030] sm:$0xff]
    %v553 = vld [vmem:[%s1 + $0x1038] sm:$0xff]
    %v554 = vld [vmem:[%s1 + $0x1040] sm:$0xff]
    %v555 = vld [vmem:[%s1 + $0x1048] sm:$0xff]
    %v556 = vld [vmem:[%s1 + $0x1050] sm:$0xff]
    %v557 = vld [vmem:[%s1 + $0x1058] sm:$0xff]
    %v558 = vld [vmem:[%s1 + $0x1060] sm:$0xff]
    %v559 = vld [vmem:[%s1 + $0x1068] sm:$0xff]
    %v560 = vld [vmem:[%s1 + $0x1070] sm:$0xff]
    %v561 = vld [vmem:[%s1 + $0x1078] sm:$0xff]
    %v562 = vld [vmem:[%s1 + $0x1080] sm:$0xff]
    %v563 = vld [vmem:[%s1 + $0x1088] sm:$0xff]
    %v564 = vld [vmem:[%s1 + $0x1090] sm:$0xff]
    %v565 = vld [vmem:[%s1 + $0x1098] sm:$0xff]
    %v566 = vld [vmem:[%s1 + $0x10a0] sm:$0xff]
    %v567 = vld [vmem:[%s1 + $0x10a8] sm:$0xff]
    %v568 = vld [vmem:[%s1 + $0x10b0] sm:$0xff]
    %v569 = vld [vmem:[%s1 + $0x10b8] sm:$0xff]
    %v570 = vld [vmem:[%s1 + $0x10c0] sm:$0xff]
    %v571 = vld [vmem:[%s1 + $0x10c8] sm:$0xff]
    %v572 = vld [vmem:[%s1 + $0x10d0] sm:$0xff]
    %v573 = vld [vmem:[%s1 + $0x10d8] sm:$0xff]
    %v574 = vld [vmem:[%s1 + $0x10e0] sm:$0xff]
    %v575 = vld [vmem:[%s1 + $0x10e8] sm:$0xff]
    %v576 = vld [vmem:[%s1 + $0x10f0] sm:$0xff]
    %v577 = vld [vmem:[%s1 + $0x10f8] sm:$0xff]
    %v578 = vld [vmem:[%s1 + $0x1100] sm:$0xff]
    %v579 = vld [vmem:[%s1 + $0x1108] sm:$0xff]
    %v580 = vld [vmem:[%s1 + $0x1110] sm:$0xff]
    %v581 = vld [vmem:[%s1 + $0x1118] sm:$0xff]
    %v582 = vld [vmem:[%s1 + $0x1120] sm:$0xff]
    %v583 = vld [vmem:[%s1 + $0x1128] sm:$0xff]
    %v584 = vld [vmem:[%s1 + $0x1130] sm:$0xff]
    %v585 = vld [vmem:[%s1 + $0x1138] sm:$0xff]
    %v586 = vld [vmem:[%s1 + $0x1140] sm:$0xff]
    %v587 = vld [vmem:[%s1 + $0x1148] sm:$0xff]
    %v588 = vld [vmem:[%s1 + $0x1150] sm:$0xff]
    %v589 = vld [vmem:[%s1 + $0x1158] sm:$0xff]
    %v590 = vld [vmem:[%s1 + $0x1160] sm:$0xff]
    %v591 = vld [vmem:[%s1 + $0x1168] sm:$0xff]
    %v592 = vld [vmem:[%s1 + $0x1170] sm:$0xff]
    %v593 = vld [vmem:[%s1 + $0x1178] sm:$0xff]
    %v594 = vld [vmem:[%s1 + $0x1180] sm:$0xff]
    %v595 = vld [vmem:[%s1 + $0x1188] sm:$0xff]
    %v596 = vld [vmem:[%s1 + $0x1190] sm:$0xff]
    %v597 = vld [vmem:[%s1 + $0x1198] sm:$0xff]
    %v598 = vld [vmem:[%s1 + $0x11a0] sm:$0xff]
    %v599 = vld [vmem:[%s1 + $0x11a8] sm:$0xff]
    %v600 = vld [vmem:[%s1 + $0x11b0] sm:$0xff]
    %v601 = vld [vmem:[%s1 + $0x11b8] sm:$0xff]
    %v602 = vld [vmem:[%s1 + $0x11c0] sm:$0xff]
    %v603 = vld [vmem:[%s1 + $0x11c8] sm:$0xff]
    %v604 = vld [vmem:[%s1 + $0x11d0] sm:$0xff]
    %v605 = vld [vmem:[%s1 + $0x11d8] sm:$0xff]
    %v606 = vld [vmem:[%s1 + $0x11e0] sm:$0xff]
    %v607 = vld [vmem:[%s1 + $0x11e8] sm:$0xff]
    %v608 = vld [vmem:[%s1 + $0x11f0] sm:$0xff]
    %v609 = vld [vmem:[%s1 + $0x11f8] sm:$0xff]
    %v610 = vld [vmem:[%s1 + $0x1200] sm:$0xff]
    %v611 = vld [vmem:[%s1 + $0x1208] sm:$0xff]
    %v612 = vld [vmem:[%s1 + $0x1210] sm:$0xff]
    %v613 = vld [vmem:[%s1 + $0x1218] sm:$0xff]
    %v614 = vld [vmem:[%s1 + $0x1220] sm:$0xff]
    %v615 = vld [vmem:[%s1 + $0x1228] sm:$0xff]
    %v616 = vld [vmem:[%s1 + $0x1230] sm:$0xff]
    %v617 = vld [vmem:[%s1 + $0x1238] sm:$0xff]
    %v618 = vld [vmem:[%s1 + $0x1240] sm:$0xff]
    %v619 = vld [vmem:[%s1 + $0x1248] sm:$0xff]
    %v620 = vld [vmem:[%s1 + $0x1250] sm:$0xff]
    %v621 = vld [vmem:[%s1 + $0x1258] sm:$0xff]
    %v622 = vld [vmem:[%s1 + $0x1260] sm:$0xff]
    %v623 = vld [vmem:[%s1 + $0x1268] sm:$0xff]
    %v624 = vld [vmem:[%s1 + $0x1270] sm:$0xff]
    %v625 = vld [vmem:[%s1 + $0x1278] sm:$0xff]
    %v626 = vld [vmem:[%s1 + $0x1280] sm:$0xff]
    %v627 = vld [vmem:[%s1 + $0x1288] sm:$0xff]
    %v628 = vld [vmem:[%s1 + $0x1290] sm:$0xff]
    %v629 = vld [vmem:[%s1 + $0x1298] sm:$0xff]
    %v630 = vld [vmem:[%s1 + $0x12a0] sm:$0xff]
    %v631 = vld [vmem:[%s1 + $0x12a8] sm:$0xff]
    %v632 = vld [vmem:[%s1 + $0x12b0] sm:$0xff]
    %v633 = vld [vmem:[%s1 + $0x12b8] sm:$0xff]
    %v634 = vld [vmem:[%s1 + $0x12c0] sm:$0xff]
    %v635 = vld [vmem:[%s1 + $0x12c8] sm:$0xff]
    %v636 = vld [vmem:[%s1 + $0x12d0] sm:$0xff]
    %v637 = vld [vmem:[%s1 + $0x12d8] sm:$0xff]
    %v638 = vld [vmem:[%s1 + $0x12e0] sm:$0xff]
    %v639 = vld [vmem:[%s1 + $0x12e8] sm:$0xff]
    %v640 = vld [vmem:[%s1 + $0x12f0] sm:$0xff]
    %v641 = vld [vmem:[%s1 + $0x12f8] sm:$0xff]
    %v642 = vld [vmem:[%s1 + $0x1300] sm:$0xff]
    %v643 = vld [vmem:[%s1 + $0x1308] sm:$0xff]
    %v644 = vld [vmem:[%s1 + $0x1310] sm:$0xff]
    %v645 = vld [vmem:[%s1 + $0x1318] sm:$0xff]
    %v646 = vld [vmem:[%s1 + $0x1320] sm:$0xff]
    %v647 = vld [vmem:[%s1 + $0x1328] sm:$0xff]
    %v648 = vld [vmem:[%s1 + $0x1330] sm:$0xff]
    %v649 = vld [vmem:[%s1 + $0x1338] sm:$0xff]
    %v650 = vld [vmem:[%s1 + $0x1340] sm:$0xff]
    %v651 = vld [vmem:[%s1 + $0x1348] sm:$0xff]
    %v652 = vld [vmem:[%s1 + $0x1350] sm:$0xff]
    %v653 = vld [vmem:[%s1 + $0x1358] sm:$0xff]
    %v654 = vld [vmem:[%s1 + $0x1360] sm:$0xff]
    %v655 = vld [vmem:[%s1 + $0x1368] sm:$0xff]
    %v656 = vld [vmem:[%s1 + $0x1370] sm:$0xff]
    %v657 = vld [vmem:[%s1 + $0x1378] sm:$0xff]
    %v658 = vld [vmem:[%s1 + $0x1380] sm:$0xff]
    %v659 = vld [vmem:[%s1 + $0x1388] sm:$0xff]
    %v660 = vld [vmem:[%s1 + $0x1390] sm:$0xff]
    %v661 = vld [vmem:[%s1 + $0x1398] sm:$0xff]
    %v662 = vld [vmem:[%s1 + $0x13a0] sm:$0xff]
    %v663 = vld [vmem:[%s1 + $0x13a8] sm:$0xff]
    %v664 = vld [vmem:[%s1 + $0x13b0] sm:$0xff]
    %v665 = vld [vmem:[%s1 + $0x13b8] sm:$0xff]
    %v666 = vld [vmem:[%s1 + $0x13c0] sm:$0xff]
    %v667 = vld [vmem:[%s1 + $0x13c8] sm:$0xff]
    %v668 = vld [vmem:[%s1 + $0x13d0] sm:$0xff]
    %v669 = vld [vmem:[%s1 + $0x13d8] sm:$0xff]
    %v670 = vld [vmem:[%s1 + $0x13e0] sm:$0xff]
    %v671 = vld [vmem:[%s1 + $0x13e8] sm:$0xff]
    %v672 = vld [vmem:[%s1 + $0x13f0] sm:$0xff]
    %v673 = vld [vmem:[%s1 + $0x13f8] sm:$0xff]
    %v674 = vld [vmem:[%s1 + $0x1400] sm:$0xff]
    %v675 = vld [vmem:[%s1 + $0x1408] sm:$0xff]
    %v676 = vld [vmem:[%s1 + $0x1410] sm:$0xff]
    %v677 = vld [vmem:[%s1 + $0x1418] sm:$0xff]
    %v678 = vld [vmem:[%s1 + $0x1420] sm:$0xff]
    %v679 = vld [vmem:[%s1 + $0x1428] sm:$0xff]
    %v680 = vld [vmem:[%s1 + $0x1430] sm:$0xff]
    %v681 = vld [vmem:[%s1 + $0x1438] sm:$0xff]
    %v682 = vld [vmem:[%s1 + $0x1440] sm:$0xff]
    %v683 = vld [vmem:[%s1 + $0x1448] sm:$0xff]
    %v684 = vld [vmem:[%s1 + $0x1450] sm:$0xff]
    %v685 = vld [vmem:[%s1 + $0x1458] sm:$0xff]
    %v686 = vld [vmem:[%s1 + $0x1460] sm:$0xff]
    %v687 = vld [vmem:[%s1 + $0x1468] sm:$0xff]
    %v688 = vld [vmem:[%s1 + $0x1470] sm:$0xff]
    %v689 = vld [vmem:[%s1 + $0x1478] sm:$0xff]
    %v690 = vld [vmem:[%s1 + $0x1480] sm:$0xff]
    %v691 = vld [vmem:[%s1 + $0x1488] sm:$0xff]
    %v692 = vld [vmem:[%s1 + $0x1490] sm:$0xff]
    %v693 = vld [vmem:[%s1 + $0x1498] sm:$0xff]
    %v694 = vld [vmem:[%s1 + $0x14a0] sm:$0xff]
    %v695 = vld [vmem:[%s1 + $0x14a8] sm:$0xff]
    %v696 = vld [vmem:[%s1 + $0x14b0] sm:$0xff]
    %v697 = vld [vmem:[%s1 + $0x14b8] sm:$0xff]
    %v698 = vld [vmem:[%s1 + $0x14c0] sm:$0xff]
    %v699 = vld [vmem:[%s1 + $0x14c8] sm:$0xff]
    %v700 = vld [vmem:[%s1 + $0x14d0] sm:$0xff]
    %v701 = vld [vmem:[%s1 + $0x14d8] sm:$0xff]
    %v702 = vld [vmem:[%s1 + $0x14e0] sm:$0xff]
    %v703 = vld [vmem:[%s1 + $0x14e8] sm:$0xff]
    %v704 = vld [vmem:[%s1 + $0x14f0] sm:$0xff]
    %v705 = vld [vmem:[%s1 + $0x14f8] sm:$0xff]
    %v706 = vld [vmem:[%s1 + $0x1500] sm:$0xff]
    %v707 = vld [vmem:[%s1 + $0x1508] sm:$0xff]
    %v708 = vld [vmem:[%s1 + $0x1510] sm:$0xff]
    %v709 = vld [vmem:[%s1 + $0x1518] sm:$0xff]
    %v710 = vld [vmem:[%s1 + $0x1520] sm:$0xff]
    %v711 = vld [vmem:[%s1 + $0x1528] sm:$0xff]
    %v712 = vld [vmem:[%s1 + $0x1530] sm:$0xff]
    %v713 = vld [vmem:[%s1 + $0x1538] sm:$0xff]
    %v714 = vld [vmem:[%s1 + $0x1540] sm:$0xff]
    %v715 = vld [vmem:[%s1 + $0x1548] sm:$0xff]
    %v716 = vld [vmem:[%s1 + $0x1550] sm:$0xff]
    %v717 = vld [vmem:[%s1 + $0x1558] sm:$0xff]
    %v718 = vld [vmem:[%s1 + $0x1560] sm:$0xff]
    %v719 = vld [vmem:[%s1 + $0x1568] sm:$0xff]
    %v720 = vld [vmem:[%s1 + $0x1570] sm:$0xff]
    %v721 = vld [vmem:[%s1 + $0x1578] sm:$0xff]
    %v722 = vld [vmem:[%s1 + $0x1580] sm:$0xff]
    %v723 = vld [vmem:[%s1 + $0x1588] sm:$0xff]
    %v724 = vld [vmem:[%s1 + $0x1590] sm:$0xff]
    %v725 = vld [vmem:[%s1 + $0x1598] sm:$0xff]
    %v726 = vld [vmem:[%s1 + $0x15a0] sm:$0xff]
    %v727 = vld [vmem:[%s1 + $0x15a8] sm:$0xff]
    %v728 = vld [vmem:[%s1 + $0x15b0] sm:$0xff]
    %v729 = vld [vmem:[%s1 + $0x15b8] sm:$0xff]
    %v730 = vld [vmem:[%s1 + $0x15c0] sm:$0xff]
    %v731 = vld [vmem:[%s1 + $0x15c8] sm:$0xff]
    %v732 = vld [vmem:[%s1 + $0x15d0] sm:$0xff]
    %v733 = vld [vmem:[%s1 + $0x15d8] sm:$0xff]
    %v734 = vld [vmem:[%s1 + $0x15e0] sm:$0xff]
    %v735 = vld [vmem:[%s1 + $0x15e8] sm:$0xff]
    %v736 = vld [vmem:[%s1 + $0x15f0] sm:$0xff]
    %v737 = vld [vmem:[%s1 + $0x15f8] sm:$0xff]
    %v738 = vld [vmem:[%s1 + $0x1600] sm:$0xff]
    %v739 = vld [vmem:[%s1 + $0x1608] sm:$0xff]
    %v740 = vld [vmem:[%s1 + $0x1610] sm:$0xff]
    %v741 = vld [vmem:[%s1 + $0x1618] sm:$0xff]
    %v742 = vld [vmem:[%s1 + $0x1620] sm:$0xff]
    %v743 = vld [vmem:[%s1 + $0x1628] sm:$0xff]
    %v744 = vld [vmem:[%s1 + $0x1630] sm:$0xff]
    %v745 = vld [vmem:[%s1 + $0x1638] sm:$0xff]
    %v746 = vld [vmem:[%s1 + $0x1640] sm:$0xff]
    %v747 = vld [vmem:[%s1 + $0x1648] sm:$0xff]
    %v748 = vld [vmem:[%s1 + $0x1650] sm:$0xff]
    %v749 = vld [vmem:[%s1 + $0x1658] sm:$0xff]
    %v750 = vld [vmem:[%s1 + $0x1660] sm:$0xff]
    %v751 = vld [vmem:[%s1 + $0x1668] sm:$0xff]
    %v752 = vld [vmem:[%s1 + $0x1670] sm:$0xff]
    %v753 = vld [vmem:[%s1 + $0x1678] sm:$0xff]
    %v754 = vld [vmem:[%s1 + $0x1680] sm:$0xff]
    %v755 = vld [vmem:[%s1 + $0x1688] sm:$0xff]
    %v756 = vld [vmem:[%s1 + $0x1690] sm:$0xff]
    %v757 = vld [vmem:[%s1 + $0x1698] sm:$0xff]
    %v758 = vld [vmem:[%s1 + $0x16a0] sm:$0xff]
    %v759 = vld [vmem:[%s1 + $0x16a8] sm:$0xff]
    %v760 = vld [vmem:[%s1 + $0x16b0] sm:$0xff]
    %v761 = vld [vmem:[%s1 + $0x16b8] sm:$0xff]
    %v762 = vld [vmem:[%s1 + $0x16c0] sm:$0xff]
    %v763 = vld [vmem:[%s1 + $0x16c8] sm:$0xff]
    %v764 = vld [vmem:[%s1 + $0x16d0] sm:$0xff]
    %v765 = vld [vmem:[%s1 + $0x16d8] sm:$0xff]
    %v766 = vld [vmem:[%s1 + $0x16e0] sm:$0xff]
    %v767 = vld [vmem:[%s1 + $0x16e8] sm:$0xff]
    %v768 = vld [vmem:[%s1 + $0x16f0] sm:$0xff]
    %v769 = vld [vmem:[%s1 + $0x16f8] sm:$0xff]
    %v770 = vld [vmem:[%s1 + $0x1700] sm:$0xff]
    %v771 = vld [vmem:[%s1 + $0x1708] sm:$0xff]
    %v772 = vld [vmem:[%s1 + $0x1710] sm:$0xff]
    %v773 = vld [vmem:[%s1 + $0x1718] sm:$0xff]
    %v774 = vld [vmem:[%s1 + $0x1720] sm:$0xff]
    %v775 = vld [vmem:[%s1 + $0x1728] sm:$0xff]
    %v776 = vld [vmem:[%s1 + $0x1730] sm:$0xff]
    %v777 = vld [vmem:[%s1 + $0x1738] sm:$0xff]
    %v778 = vld [vmem:[%s1 + $0x1740] sm:$0xff]
    %v779 = vld [vmem:[%s1 + $0x1748] sm:$0xff]
    %v780 = vld [vmem:[%s1 + $0x1750] sm:$0xff]
    %v781 = vld [vmem:[%s1 + $0x1758] sm:$0xff]
    %v782 = vld [vmem:[%s1 + $0x1760] sm:$0xff]
    %v783 = vld [vmem:[%s1 + $0x1768] sm:$0xff]
    %v784 = vld [vmem:[%s1 + $0x1770] sm:$0xff]
    %v785 = vld [vmem:[%s1 + $0x1778] sm:$0xff]
    %v786 = vld [vmem:[%s1 + $0x1780] sm:$0xff]
    %v787 = vld [vmem:[%s1 + $0x1788] sm:$0xff]
    %v788 = vld [vmem:[%s1 + $0x1790] sm:$0xff]
    %v789 = vld [vmem:[%s1 + $0x1798] sm:$0xff]
    %v790 = vld [vmem:[%s1 + $0x17a0] sm:$0xff]
    %v791 = vld [vmem:[%s1 + $0x17a8] sm:$0xff]
    %v792 = vld [vmem:[%s1 + $0x17b0] sm:$0xff]
    %v793 = vld [vmem:[%s1 + $0x17b8] sm:$0xff]
    %v794 = vld [vmem:[%s1 + $0x17c0] sm:$0xff]
    %v795 = vld [vmem:[%s1 + $0x17c8] sm:$0xff]
    %v796 = vld [vmem:[%s1 + $0x17d0] sm:$0xff]
    %v797 = vld [vmem:[%s1 + $0x17d8] sm:$0xff]
    %v798 = vld [vmem:[%s1 + $0x17e0] sm:$0xff]
    %v799 = vld [vmem:[%s1 + $0x17e8] sm:$0xff]
    %v800 = vld [vmem:[%s1 + $0x17f0] sm:$0xff]
    %v801 = vld [vmem:[%s1 + $0x17f8] sm:$0xff]
    %v802 = vld [vmem:[%s1 + $0x1800] sm:$0xff]
    %v803 = vld [vmem:[%s1 + $0x1808] sm:$0xff]
    %v804 = vld [vmem:[%s1 + $0x1810] sm:$0xff]
    %v805 = vld [vmem:[%s1 + $0x1818] sm:$0xff]
    %v806 = vld [vmem:[%s1 + $0x1820] sm:$0xff]
    %v807 = vld [vmem:[%s1 + $0x1828] sm:$0xff]
    %v808 = vld [vmem:[%s1 + $0x1830] sm:$0xff]
    %v809 = vld [vmem:[%s1 + $0x1838] sm:$0xff]
    %v810 = vld [vmem:[%s1 + $0x1840] sm:$0xff]
    %v811 = vld [vmem:[%s1 + $0x1848] sm:$0xff]
    %v812 = vld [vmem:[%s1 + $0x1850] sm:$0xff]
    %v813 = vld [vmem:[%s1 + $0x1858] sm:$0xff]
    %v814 = vld [vmem:[%s1 + $0x1860] sm:$0xff]
    %v815 = vld [vmem:[%s1 + $0x1868] sm:$0xff]
    %v816 = vld [vmem:[%s1 + $0x1870] sm:$0xff]
    %v817 = vld [vmem:[%s1 + $0x1878] sm:$0xff]
    %v818 = vld [vmem:[%s2] sm:$0x3]
    %v820 = vlaneseq
    %v821 = vshrl.u32 %v820, 7
    %v822 = vsub.s32 0, %v821
    %v823 = vrot.slane %v818, %v822
    %v824 = vlaneseq
    %v825 = vshrl.u32 %v824, 7
    %v826 = vsub.s32 1, %v825
    %v827 = vrot.slane %v818, %v826
    %v837 = vcombine.high %v27, %v27
    %v839 = vunpack.c.l.s4 1983009808
    %v840 = vunpack.c.0.s8 %v839
    %v841 = vlaneseq
    %v842 = vshrl.u32 %v841, 7
    %v843 = vsub.s32 %v840, %v842
    %v844 = vrot.slane %v27, %v843
    %v846 = vunpack.c.l.s4 1983009808
    %v847 = vunpack.c.0.s8 %v846
    %v848 = vlaneseq
    %v849 = vshrl.u32 %v848, 7
    %v850 = vsub.s32 %v847, %v849
    %v851 = vrot.slane %v837, %v850
    %v852 = vcombine.high %v844, %v844
    %v853 = vcombine.high %v851, %v851
    %v854 = vcombine.high %v28, %v28
    %v856 = vunpack.c.l.s4 1983009808
    %v857 = vunpack.c.0.s8 %v856
    %v858 = vlaneseq
    %v859 = vshrl.u32 %v858, 7
    %v860 = vsub.s32 %v857, %v859
    %v861 = vrot.slane %v28, %v860
    %v863 = vunpack.c.l.s4 1983009808
    %v864 = vunpack.c.0.s8 %v863
    %v865 = vlaneseq
    %v866 = vshrl.u32 %v865, 7
    %v867 = vsub.s32 %v864, %v866
    %v868 = vrot.slane %v854, %v867
    %v869 = vcombine.high %v861, %v861
    %v870 = vcombine.high %v868, %v868
    %v871 = vcombine.high %v29, %v29
    %v873 = vunpack.c.l.s4 1983009808
    %v874 = vunpack.c.0.s8 %v873
    %v875 = vlaneseq
    %v876 = vshrl.u32 %v875, 7
    %v877 = vsub.s32 %v874, %v876
    %v878 = vrot.slane %v29, %v877
    %v880 = vunpack.c.l.s4 1983009808
    %v881 = vunpack.c.0.s8 %v880
    %v882 = vlaneseq
    %v883 = vshrl.u32 %v882, 7
    %v884 = vsub.s32 %v881, %v883
    %v885 = vrot.slane %v871, %v884
    %v886 = vcombine.high %v878, %v878
    %v887 = vcombine.high %v885, %v885
    %v888 = vcombine.high %v30, %v30
    %v890 = vunpack.c.l.s4 1983009808
    %v891 = vunpack.c.0.s8 %v890
    %v892 = vlaneseq
    %v893 = vshrl.u32 %v892, 7
    %v894 = vsub.s32 %v891, %v893
    %v895 = vrot.slane %v30, %v894
    %v897 = vunpack.c.l.s4 1983009808
    %v898 = vunpack.c.0.s8 %v897
    %v899 = vlaneseq
    %v900 = vshrl.u32 %v899, 7
    %v901 = vsub.s32 %v898, %v900
    %v902 = vrot.slane %v888, %v901
    %v903 = vcombine.high %v895, %v895
    %v904 = vcombine.high %v902, %v902
    %v905 = vcombine.high %v31, %v31
    %v907 = vunpack.c.l.s4 1983009808
    %v908 = vunpack.c.0.s8 %v907
    %v909 = vlaneseq
    %v910 = vshrl.u32 %v909, 7
    %v911 = vsub.s32 %v908, %v910
    %v912 = vrot.slane %v31, %v911
    %v914 = vunpack.c.l.s4 1983009808
    %v915 = vunpack.c.0.s8 %v914
    %v916 = vlaneseq
    %v917 = vshrl.u32 %v916, 7
    %v918 = vsub.s32 %v915, %v917
    %v919 = vrot.slane %v905, %v918
    %v920 = vcombine.high %v912, %v912
    %v921 = vcombine.high %v919, %v919
    %v922 = vcombine.high %v32, %v32
    %v924 = vunpack.c.l.s4 1983009808
    %v925 = vunpack.c.0.s8 %v924
    %v926 = vlaneseq
    %v927 = vshrl.u32 %v926, 7
    %v928 = vsub.s32 %v925, %v927
    %v929 = vrot.slane %v32, %v928
    %v931 = vunpack.c.l.s4 1983009808
    %v932 = vunpack.c.0.s8 %v931
    %v933 = vlaneseq
    %v934 = vshrl.u32 %v933, 7
    %v935 = vsub.s32 %v932, %v934
    %v936 = vrot.slane %v922, %v935
    %v937 = vcombine.high %v929, %v929
    %v938 = vcombine.high %v936, %v936
    %v940 = vunpack.c.l.s4 1983009808
    %v941 = vunpack.c.0.s8 %v940
    %v942 = vlaneseq
    %v943 = vshrl.u32 %v942, 7
    %v944 = vsub.s32 %v941, %v943
    %v945 = vrot.slane %v33, %v944
    %vm970 = vcmask 523264
    %v971 = vsel %vm970, %v945, 0
    %973 = vmatprep.subr.mxu0 %v35
    %974 = vmatpush1.msra.mxu0 %v34
    %975 = vmatprep.subr.mxu0 %v37
    %976 = vmatpush1.msra.mxu0 %v36
    %977 = vmatprep.subr.mxu0 %v39
    %978 = vmatpush1.msra.mxu0 %v38
    %979 = vmatprep.subr.mxu0 %v41
    %980 = vmatpush1.msra.mxu0 %v40
    %981 = vmatprep.subr.mxu0 %v43
    %982 = vmatpush1.msra.mxu0 %v42
    %983 = vmatprep.subr.mxu0 %v45
    %984 = vmatpush1.msra.mxu0 %v44
    %985 = vmatprep.subr.mxu0 %v47
    %986 = vmatpush1.msra.mxu0 %v46
    %987 = vmatprep.subr.mxu0 %v49
    %988 = vmatpush1.msra.mxu0 %v48
    %989 = vmatprep.subr.mxu0 %v51
    %990 = vmatpush1.msra.mxu0 %v50
    %991 = vmatprep.subr.mxu0 %v53
    %992 = vmatpush1.msra.mxu0 %v52
    %993 = vmatprep.subr.mxu0 %v55
    %994 = vmatpush1.msra.mxu0 %v54
    %995 = vmatprep.subr.mxu0 %v57
    %996 = vmatpush1.msra.mxu0 %v56
    %997 = vmatprep.subr.mxu0 %v59
    %998 = vmatpush1.msra.mxu0 %v58
    %999 = vmatprep.subr.mxu0 %v61
    %1000 = vmatpush1.msra.mxu0 %v60
    %1001 = vmatprep.subr.mxu0 %v63
    %1002 = vmatpush1.msra.mxu0 %v62
    %1003 = vmatprep.subr.mxu0 %v65
    %1004 = vmatpush1.msra.mxu0 %v64
    %1005 = vmatprep.subr.mxu0 %v67
    %1006 = vmatpush1.msra.mxu0 %v66
    %1007 = vmatprep.subr.mxu0 %v69
    %1008 = vmatpush1.msra.mxu0 %v68
    %1009 = vmatprep.subr.mxu0 %v71
    %1010 = vmatpush1.msra.mxu0 %v70
    %1011 = vmatprep.subr.mxu0 %v73
    %1012 = vmatpush1.msra.mxu0 %v72
    %1013 = vmatprep.subr.mxu0 %v75
    %1014 = vmatpush1.msra.mxu0 %v74
    %1015 = vmatprep.subr.mxu0 %v77
    %1016 = vmatpush1.msra.mxu0 %v76
    %1017 = vmatprep.subr.mxu0 %v79
    %1018 = vmatpush1.msra.mxu0 %v78
    %1019 = vmatprep.subr.mxu0 %v81
    %1020 = vmatpush1.msra.mxu0 %v80
    %1021 = vmatprep.subr.mxu0 %v83
    %1022 = vmatpush1.msra.mxu0 %v82
    %1023 = vmatprep.subr.mxu0 %v85
    %1024 = vmatpush1.msra.mxu0 %v84
    %1025 = vmatprep.subr.mxu0 %v87
    %1026 = vmatpush1.msra.mxu0 %v86
    %1027 = vmatprep.subr.mxu0 %v89
    %1028 = vmatpush1.msra.mxu0 %v88
    %1029 = vmatprep.subr.mxu0 %v91
    %1030 = vmatpush1.msra.mxu0 %v90
    %1031 = vmatprep.subr.mxu0 %v93
    %1032 = vmatpush1.msra.mxu0 %v92
    %1033 = vmatprep.subr.mxu0 %v95
    %1034 = vmatpush1.msra.mxu0 %v94
    %1035 = vmatprep.subr.mxu0 %v97
    %1036 = vmatpush1.msra.mxu0 %v96
    %1037 = vmatprep.mubr.f32.mxu0 %v852
    %1038 = vmatmul.mubr.f32.gmra.mrb[0].mxu0 %v844
    %v1039 = vpop.f32.mrb[0].mxu0
    %v1040 = vadd.f32 %v823, %v1039
    %v1041 = vpop.f32.mrb[0].mxu0
    %v1042 = vadd.f32 %v827, %v1041
    %1043 = vdwg.mxu0
    %1044 = vmatprep.subr.mxu0 %v99
    %1045 = vmatpush1.msra.mxu0 %v98
    %1046 = vmatprep.subr.mxu0 %v101
    %1047 = vmatpush1.msra.mxu0 %v100
    %1048 = vmatprep.subr.mxu0 %v103
    %1049 = vmatpush1.msra.mxu0 %v102
    %1050 = vmatprep.subr.mxu0 %v105
    %1051 = vmatpush1.msra.mxu0 %v104
    %1052 = vmatprep.subr.mxu0 %v107
    %1053 = vmatpush1.msra.mxu0 %v106
    %1054 = vmatprep.subr.mxu0 %v109
    %1055 = vmatpush1.msra.mxu0 %v108
    %1056 = vmatprep.subr.mxu0 %v111
    %1057 = vmatpush1.msra.mxu0 %v110
    %1058 = vmatprep.subr.mxu0 %v113
    %1059 = vmatpush1.msra.mxu0 %v112
    %1060 = vmatprep.subr.mxu0 %v115
    %1061 = vmatpush1.msra.mxu0 %v114
    %1062 = vmatprep.subr.mxu0 %v117
    %1063 = vmatpush1.msra.mxu0 %v116
    %1064 = vmatprep.subr.mxu0 %v119
    %1065 = vmatpush1.msra.mxu0 %v118
    %1066 = vmatprep.subr.mxu0 %v121
    %1067 = vmatpush1.msra.mxu0 %v120
    %1068 = vmatprep.subr.mxu0 %v123
    %1069 = vmatpush1.msra.mxu0 %v122
    %1070 = vmatprep.subr.mxu0 %v125
    %1071 = vmatpush1.msra.mxu0 %v124
    %1072 = vmatprep.subr.mxu0 %v127
    %1073 = vmatpush1.msra.mxu0 %v126
    %1074 = vmatprep.subr.mxu0 %v129
    %1075 = vmatpush1.msra.mxu0 %v128
    %1076 = vmatprep.subr.mxu0 %v131
    %1077 = vmatpush1.msra.mxu0 %v130
    %1078 = vmatprep.subr.mxu0 %v133
    %1079 = vmatpush1.msra.mxu0 %v132
    %1080 = vmatprep.subr.mxu0 %v135
    %1081 = vmatpush1.msra.mxu0 %v134
    %1082 = vmatprep.subr.mxu0 %v137
    %1083 = vmatpush1.msra.mxu0 %v136
    %1084 = vmatprep.subr.mxu0 %v139
    %1085 = vmatpush1.msra.mxu0 %v138
    %1086 = vmatprep.subr.mxu0 %v141
    %1087 = vmatpush1.msra.mxu0 %v140
    %1088 = vmatprep.subr.mxu0 %v143
    %1089 = vmatpush1.msra.mxu0 %v142
    %1090 = vmatprep.subr.mxu0 %v145
    %1091 = vmatpush1.msra.mxu0 %v144
    %1092 = vmatprep.subr.mxu0 %v147
    %1093 = vmatpush1.msra.mxu0 %v146
    %1094 = vmatprep.subr.mxu0 %v149
    %1095 = vmatpush1.msra.mxu0 %v148
    %1096 = vmatprep.subr.mxu0 %v151
    %1097 = vmatpush1.msra.mxu0 %v150
    %1098 = vmatprep.subr.mxu0 %v153
    %1099 = vmatpush1.msra.mxu0 %v152
    %1100 = vmatprep.subr.mxu0 %v155
    %1101 = vmatpush1.msra.mxu0 %v154
    %1102 = vmatprep.subr.mxu0 %v157
    %1103 = vmatpush1.msra.mxu0 %v156
    %1104 = vmatprep.subr.mxu0 %v159
    %1105 = vmatpush1.msra.mxu0 %v158
    %1106 = vmatprep.subr.mxu0 %v161
    %1107 = vmatpush1.msra.mxu0 %v160
    %1108 = vmatprep.mubr.f32.mxu0 %v853
    %1109 = vmatmul.mubr.f32.gmra.mrb[0].mxu0 %v851
    %v1110 = vpop.f32.mrb[0].mxu0
    %v1111 = vadd.f32 %v1040, %v1110
    %v1112 = vpop.f32.mrb[0].mxu0
    %v1113 = vadd.f32 %v1042, %v1112
    %1114 = vdwg.mxu0
    %1115 = vmatprep.subr.mxu0 %v163
    %1116 = vmatpush1.msra.mxu0 %v162
    %1117 = vmatprep.subr.mxu0 %v165
    %1118 = vmatpush1.msra.mxu0 %v164
    %1119 = vmatprep.subr.mxu0 %v167
    %1120 = vmatpush1.msra.mxu0 %v166
    %1121 = vmatprep.subr.mxu0 %v169
    %1122 = vmatpush1.msra.mxu0 %v168
    %1123 = vmatprep.subr.mxu0 %v171
    %1124 = vmatpush1.msra.mxu0 %v170
    %1125 = vmatprep.subr.mxu0 %v173
    %1126 = vmatpush1.msra.mxu0 %v172
    %1127 = vmatprep.subr.mxu0 %v175
    %1128 = vmatpush1.msra.mxu0 %v174
    %1129 = vmatprep.subr.mxu0 %v177
    %1130 = vmatpush1.msra.mxu0 %v176
    %1131 = vmatprep.subr.mxu0 %v179
    %1132 = vmatpush1.msra.mxu0 %v178
    %1133 = vmatprep.subr.mxu0 %v181
    %1134 = vmatpush1.msra.mxu0 %v180
    %1135 = vmatprep.subr.mxu0 %v183
    %1136 = vmatpush1.msra.mxu0 %v182
    %1137 = vmatprep.subr.mxu0 %v185
    %1138 = vmatpush1.msra.mxu0 %v184
    %1139 = vmatprep.subr.mxu0 %v187
    %1140 = vmatpush1.msra.mxu0 %v186
    %1141 = vmatprep.subr.mxu0 %v189
    %1142 = vmatpush1.msra.mxu0 %v188
    %1143 = vmatprep.subr.mxu0 %v191
    %1144 = vmatpush1.msra.mxu0 %v190
    %1145 = vmatprep.subr.mxu0 %v193
    %1146 = vmatpush1.msra.mxu0 %v192
    %1147 = vmatprep.subr.mxu0 %v195
    %1148 = vmatpush1.msra.mxu0 %v194
    %1149 = vmatprep.subr.mxu0 %v197
    %1150 = vmatpush1.msra.mxu0 %v196
    %1151 = vmatprep.subr.mxu0 %v199
    %1152 = vmatpush1.msra.mxu0 %v198
    %1153 = vmatprep.subr.mxu0 %v201
    %1154 = vmatpush1.msra.mxu0 %v200
    %1155 = vmatprep.subr.mxu0 %v203
    %1156 = vmatpush1.msra.mxu0 %v202
    %1157 = vmatprep.subr.mxu0 %v205
    %1158 = vmatpush1.msra.mxu0 %v204
    %1159 = vmatprep.subr.mxu0 %v207
    %1160 = vmatpush1.msra.mxu0 %v206
    %1161 = vmatprep.subr.mxu0 %v209
    %1162 = vmatpush1.msra.mxu0 %v208
    %1163 = vmatprep.subr.mxu0 %v211
    %1164 = vmatpush1.msra.mxu0 %v210
    %1165 = vmatprep.subr.mxu0 %v213
    %1166 = vmatpush1.msra.mxu0 %v212
    %1167 = vmatprep.subr.mxu0 %v215
    %1168 = vmatpush1.msra.mxu0 %v214
    %1169 = vmatprep.subr.mxu0 %v217
    %1170 = vmatpush1.msra.mxu0 %v216
    %1171 = vmatprep.subr.mxu0 %v219
    %1172 = vmatpush1.msra.mxu0 %v218
    %1173 = vmatprep.subr.mxu0 %v221
    %1174 = vmatpush1.msra.mxu0 %v220
    %1175 = vmatprep.subr.mxu0 %v223
    %1176 = vmatpush1.msra.mxu0 %v222
    %1177 = vmatprep.subr.mxu0 %v225
    %1178 = vmatpush1.msra.mxu0 %v224
    %1179 = vmatprep.mubr.f32.mxu0 %v869
    %1180 = vmatmul.mubr.f32.gmra.mrb[0].mxu0 %v861
    %v1181 = vpop.f32.mrb[0].mxu0
    %v1182 = vadd.f32 %v1111, %v1181
    %v1183 = vpop.f32.mrb[0].mxu0
    %v1184 = vadd.f32 %v1113, %v1183
    %1185 = vdwg.mxu0
    %1186 = vmatprep.subr.mxu0 %v227
    %1187 = vmatpush1.msra.mxu0 %v226
    %1188 = vmatprep.subr.mxu0 %v229
    %1189 = vmatpush1.msra.mxu0 %v228
    %1190 = vmatprep.subr.mxu0 %v231
    %1191 = vmatpush1.msra.mxu0 %v230
    %1192 = vmatprep.subr.mxu0 %v233
    %1193 = vmatpush1.msra.mxu0 %v232
    %1194 = vmatprep.subr.mxu0 %v235
    %1195 = vmatpush1.msra.mxu0 %v234
    %1196 = vmatprep.subr.mxu0 %v237
    %1197 = vmatpush1.msra.mxu0 %v236
    %1198 = vmatprep.subr.mxu0 %v239
    %1199 = vmatpush1.msra.mxu0 %v238
    %1200 = vmatprep.subr.mxu0 %v241
    %1201 = vmatpush1.msra.mxu0 %v240
    %1202 = vmatprep.subr.mxu0 %v243
    %1203 = vmatpush1.msra.mxu0 %v242
    %1204 = vmatprep.subr.mxu0 %v245
    %1205 = vmatpush1.msra.mxu0 %v244
    %1206 = vmatprep.subr.mxu0 %v247
    %1207 = vmatpush1.msra.mxu0 %v246
    %1208 = vmatprep.subr.mxu0 %v249
    %1209 = vmatpush1.msra.mxu0 %v248
    %1210 = vmatprep.subr.mxu0 %v251
    %1211 = vmatpush1.msra.mxu0 %v250
    %1212 = vmatprep.subr.mxu0 %v253
    %1213 = vmatpush1.msra.mxu0 %v252
    %1214 = vmatprep.subr.mxu0 %v255
    %1215 = vmatpush1.msra.mxu0 %v254
    %1216 = vmatprep.subr.mxu0 %v257
    %1217 = vmatpush1.msra.mxu0 %v256
    %1218 = vmatprep.subr.mxu0 %v259
    %1219 = vmatpush1.msra.mxu0 %v258
    %1220 = vmatprep.subr.mxu0 %v261
    %1221 = vmatpush1.msra.mxu0 %v260
    %1222 = vmatprep.subr.mxu0 %v263
    %1223 = vmatpush1.msra.mxu0 %v262
    %1224 = vmatprep.subr.mxu0 %v265
    %1225 = vmatpush1.msra.mxu0 %v264
    %1226 = vmatprep.subr.mxu0 %v267
    %1227 = vmatpush1.msra.mxu0 %v266
    %1228 = vmatprep.subr.mxu0 %v269
    %1229 = vmatpush1.msra.mxu0 %v268
    %1230 = vmatprep.subr.mxu0 %v271
    %1231 = vmatpush1.msra.mxu0 %v270
    %1232 = vmatprep.subr.mxu0 %v273
    %1233 = vmatpush1.msra.mxu0 %v272
    %1234 = vmatprep.subr.mxu0 %v275
    %1235 = vmatpush1.msra.mxu0 %v274
    %1236 = vmatprep.subr.mxu0 %v277
    %1237 = vmatpush1.msra.mxu0 %v276
    %1238 = vmatprep.subr.mxu0 %v279
    %1239 = vmatpush1.msra.mxu0 %v278
    %1240 = vmatprep.subr.mxu0 %v281
    %1241 = vmatpush1.msra.mxu0 %v280
    %1242 = vmatprep.subr.mxu0 %v283
    %1243 = vmatpush1.msra.mxu0 %v282
    %1244 = vmatprep.subr.mxu0 %v285
    %1245 = vmatpush1.msra.mxu0 %v284
    %1246 = vmatprep.subr.mxu0 %v287
    %1247 = vmatpush1.msra.mxu0 %v286
    %1248 = vmatprep.subr.mxu0 %v289
    %1249 = vmatpush1.msra.mxu0 %v288
    %1250 = vmatprep.mubr.f32.mxu0 %v870
    %1251 = vmatmul.mubr.f32.gmra.mrb[0].mxu0 %v868
    %v1252 = vpop.f32.mrb[0].mxu0
    %v1253 = vadd.f32 %v1182, %v1252
    %v1254 = vpop.f32.mrb[0].mxu0
    %v1255 = vadd.f32 %v1184, %v1254
    %1256 = vdwg.mxu0
    %1257 = vmatprep.subr.mxu0 %v291
    %1258 = vmatpush1.msra.mxu0 %v290
    %1259 = vmatprep.subr.mxu0 %v293
    %1260 = vmatpush1.msra.mxu0 %v292
    %1261 = vmatprep.subr.mxu0 %v295
    %1262 = vmatpush1.msra.mxu0 %v294
    %1263 = vmatprep.subr.mxu0 %v297
    %1264 = vmatpush1.msra.mxu0 %v296
    %1265 = vmatprep.subr.mxu0 %v299
    %1266 = vmatpush1.msra.mxu0 %v298
    %1267 = vmatprep.subr.mxu0 %v301
    %1268 = vmatpush1.msra.mxu0 %v300
    %1269 = vmatprep.subr.mxu0 %v303
    %1270 = vmatpush1.msra.mxu0 %v302
    %1271 = vmatprep.subr.mxu0 %v305
    %1272 = vmatpush1.msra.mxu0 %v304
    %1273 = vmatprep.subr.mxu0 %v307
    %1274 = vmatpush1.msra.mxu0 %v306
    %1275 = vmatprep.subr.mxu0 %v309
    %1276 = vmatpush1.msra.mxu0 %v308
    %1277 = vmatprep.subr.mxu0 %v311
    %1278 = vmatpush1.msra.mxu0 %v310
    %1279 = vmatprep.subr.mxu0 %v313
    %1280 = vmatpush1.msra.mxu0 %v312
    %1281 = vmatprep.subr.mxu0 %v315
    %1282 = vmatpush1.msra.mxu0 %v314
    %1283 = vmatprep.subr.mxu0 %v317
    %1284 = vmatpush1.msra.mxu0 %v316
    %1285 = vmatprep.subr.mxu0 %v319
    %1286 = vmatpush1.msra.mxu0 %v318
    %1287 = vmatprep.subr.mxu0 %v321
    %1288 = vmatpush1.msra.mxu0 %v320
    %1289 = vmatprep.subr.mxu0 %v323
    %1290 = vmatpush1.msra.mxu0 %v322
    %1291 = vmatprep.subr.mxu0 %v325
    %1292 = vmatpush1.msra.mxu0 %v324
    %1293 = vmatprep.subr.mxu0 %v327
    %1294 = vmatpush1.msra.mxu0 %v326
    %1295 = vmatprep.subr.mxu0 %v329
    %1296 = vmatpush1.msra.mxu0 %v328
    %1297 = vmatprep.subr.mxu0 %v331
    %1298 = vmatpush1.msra.mxu0 %v330
    %1299 = vmatprep.subr.mxu0 %v333
    %1300 = vmatpush1.msra.mxu0 %v332
    %1301 = vmatprep.subr.mxu0 %v335
    %1302 = vmatpush1.msra.mxu0 %v334
    %1303 = vmatprep.subr.mxu0 %v337
    %1304 = vmatpush1.msra.mxu0 %v336
    %1305 = vmatprep.subr.mxu0 %v339
    %1306 = vmatpush1.msra.mxu0 %v338
    %1307 = vmatprep.subr.mxu0 %v341
    %1308 = vmatpush1.msra.mxu0 %v340
    %1309 = vmatprep.subr.mxu0 %v343
    %1310 = vmatpush1.msra.mxu0 %v342
    %1311 = vmatprep.subr.mxu0 %v345
    %1312 = vmatpush1.msra.mxu0 %v344
    %1313 = vmatprep.subr.mxu0 %v347
    %1314 = vmatpush1.msra.mxu0 %v346
    %1315 = vmatprep.subr.mxu0 %v349
    %1316 = vmatpush1.msra.mxu0 %v348
    %1317 = vmatprep.subr.mxu0 %v351
    %1318 = vmatpush1.msra.mxu0 %v350
    %1319 = vmatprep.subr.mxu0 %v353
    %1320 = vmatpush1.msra.mxu0 %v352
    %1321 = vmatprep.mubr.f32.mxu0 %v886
    %1322 = vmatmul.mubr.f32.gmra.mrb[0].mxu0 %v878
    %v1323 = vpop.f32.mrb[0].mxu0
    %v1324 = vadd.f32 %v1253, %v1323
    %v1325 = vpop.f32.mrb[0].mxu0
    %v1326 = vadd.f32 %v1255, %v1325
    %1327 = vdwg.mxu0
    %1328 = vmatprep.subr.mxu0 %v355
    %1329 = vmatpush1.msra.mxu0 %v354
    %1330 = vmatprep.subr.mxu0 %v357
    %1331 = vmatpush1.msra.mxu0 %v356
    %1332 = vmatprep.subr.mxu0 %v359
    %1333 = vmatpush1.msra.mxu0 %v358
    %1334 = vmatprep.subr.mxu0 %v361
    %1335 = vmatpush1.msra.mxu0 %v360
    %1336 = vmatprep.subr.mxu0 %v363
    %1337 = vmatpush1.msra.mxu0 %v362
    %1338 = vmatprep.subr.mxu0 %v365
    %1339 = vmatpush1.msra.mxu0 %v364
    %1340 = vmatprep.subr.mxu0 %v367
    %1341 = vmatpush1.msra.mxu0 %v366
    %1342 = vmatprep.subr.mxu0 %v369
    %1343 = vmatpush1.msra.mxu0 %v368
    %1344 = vmatprep.subr.mxu0 %v371
    %1345 = vmatpush1.msra.mxu0 %v370
    %1346 = vmatprep.subr.mxu0 %v373
    %1347 = vmatpush1.msra.mxu0 %v372
    %1348 = vmatprep.subr.mxu0 %v375
    %1349 = vmatpush1.msra.mxu0 %v374
    %1350 = vmatprep.subr.mxu0 %v377
    %1351 = vmatpush1.msra.mxu0 %v376
    %1352 = vmatprep.subr.mxu0 %v379
    %1353 = vmatpush1.msra.mxu0 %v378
    %1354 = vmatprep.subr.mxu0 %v381
    %1355 = vmatpush1.msra.mxu0 %v380
    %1356 = vmatprep.subr.mxu0 %v383
    %1357 = vmatpush1.msra.mxu0 %v382
    %1358 = vmatprep.subr.mxu0 %v385
    %1359 = vmatpush1.msra.mxu0 %v384
    %1360 = vmatprep.subr.mxu0 %v387
    %1361 = vmatpush1.msra.mxu0 %v386
    %1362 = vmatprep.subr.mxu0 %v389
    %1363 = vmatpush1.msra.mxu0 %v388
    %1364 = vmatprep.subr.mxu0 %v391
    %1365 = vmatpush1.msra.mxu0 %v390
    %1366 = vmatprep.subr.mxu0 %v393
    %1367 = vmatpush1.msra.mxu0 %v392
    %1368 = vmatprep.subr.mxu0 %v395
    %1369 = vmatpush1.msra.mxu0 %v394
    %1370 = vmatprep.subr.mxu0 %v397
    %1371 = vmatpush1.msra.mxu0 %v396
    %1372 = vmatprep.subr.mxu0 %v399
    %1373 = vmatpush1.msra.mxu0 %v398
    %1374 = vmatprep.subr.mxu0 %v401
    %1375 = vmatpush1.msra.mxu0 %v400
    %1376 = vmatprep.subr.mxu0 %v403
    %1377 = vmatpush1.msra.mxu0 %v402
    %1378 = vmatprep.subr.mxu0 %v405
    %1379 = vmatpush1.msra.mxu0 %v404
    %1380 = vmatprep.subr.mxu0 %v407
    %1381 = vmatpush1.msra.mxu0 %v406
    %1382 = vmatprep.subr.mxu0 %v409
    %1383 = vmatpush1.msra.mxu0 %v408
    %1384 = vmatprep.subr.mxu0 %v411
    %1385 = vmatpush1.msra.mxu0 %v410
    %1386 = vmatprep.subr.mxu0 %v413
    %1387 = vmatpush1.msra.mxu0 %v412
    %1388 = vmatprep.subr.mxu0 %v415
    %1389 = vmatpush1.msra.mxu0 %v414
    %1390 = vmatprep.subr.mxu0 %v417
    %1391 = vmatpush1.msra.mxu0 %v416
    %1392 = vmatprep.mubr.f32.mxu0 %v887
    %1393 = vmatmul.mubr.f32.gmra.mrb[0].mxu0 %v885
    %v1394 = vpop.f32.mrb[0].mxu0
    %v1395 = vadd.f32 %v1324, %v1394
    %v1396 = vpop.f32.mrb[0].mxu0
    %v1397 = vadd.f32 %v1326, %v1396
    %1398 = vdwg.mxu0
    %1399 = vmatprep.subr.mxu0 %v419
    %1400 = vmatpush1.msra.mxu0 %v418
    %1401 = vmatprep.subr.mxu0 %v421
    %1402 = vmatpush1.msra.mxu0 %v420
    %1403 = vmatprep.subr.mxu0 %v423
    %1404 = vmatpush1.msra.mxu0 %v422
    %1405 = vmatprep.subr.mxu0 %v425
    %1406 = vmatpush1.msra.mxu0 %v424
    %1407 = vmatprep.subr.mxu0 %v427
    %1408 = vmatpush1.msra.mxu0 %v426
    %1409 = vmatprep.subr.mxu0 %v429
    %1410 = vmatpush1.msra.mxu0 %v428
    %1411 = vmatprep.subr.mxu0 %v431
    %1412 = vmatpush1.msra.mxu0 %v430
    %1413 = vmatprep.subr.mxu0 %v433
    %1414 = vmatpush1.msra.mxu0 %v432
    %1415 = vmatprep.subr.mxu0 %v435
    %1416 = vmatpush1.msra.mxu0 %v434
    %1417 = vmatprep.subr.mxu0 %v437
    %1418 = vmatpush1.msra.mxu0 %v436
    %1419 = vmatprep.subr.mxu0 %v439
    %1420 = vmatpush1.msra.mxu0 %v438
    %1421 = vmatprep.subr.mxu0 %v441
    %1422 = vmatpush1.msra.mxu0 %v440
    %1423 = vmatprep.subr.mxu0 %v443
    %1424 = vmatpush1.msra.mxu0 %v442
    %1425 = vmatprep.subr.mxu0 %v445
    %1426 = vmatpush1.msra.mxu0 %v444
    %1427 = vmatprep.subr.mxu0 %v447
    %1428 = vmatpush1.msra.mxu0 %v446
    %1429 = vmatprep.subr.mxu0 %v449
    %1430 = vmatpush1.msra.mxu0 %v448
    %1431 = vmatprep.subr.mxu0 %v451
    %1432 = vmatpush1.msra.mxu0 %v450
    %1433 = vmatprep.subr.mxu0 %v453
    %1434 = vmatpush1.msra.mxu0 %v452
    %1435 = vmatprep.subr.mxu0 %v455
    %1436 = vmatpush1.msra.mxu0 %v454
    %1437 = vmatprep.subr.mxu0 %v457
    %1438 = vmatpush1.msra.mxu0 %v456
    %1439 = vmatprep.subr.mxu0 %v459
    %1440 = vmatpush1.msra.mxu0 %v458
    %1441 = vmatprep.subr.mxu0 %v461
    %1442 = vmatpush1.msra.mxu0 %v460
    %1443 = vmatprep.subr.mxu0 %v463
    %1444 = vmatpush1.msra.mxu0 %v462
    %1445 = vmatprep.subr.mxu0 %v465
    %1446 = vmatpush1.msra.mxu0 %v464
    %1447 = vmatprep.subr.mxu0 %v467
    %1448 = vmatpush1.msra.mxu0 %v466
    %1449 = vmatprep.subr.mxu0 %v469
    %1450 = vmatpush1.msra.mxu0 %v468
    %1451 = vmatprep.subr.mxu0 %v471
    %1452 = vmatpush1.msra.mxu0 %v470
    %1453 = vmatprep.subr.mxu0 %v473
    %1454 = vmatpush1.msra.mxu0 %v472
    %1455 = vmatprep.subr.mxu0 %v475
    %1456 = vmatpush1.msra.mxu0 %v474
    %1457 = vmatprep.subr.mxu0 %v477
    %1458 = vmatpush1.msra.mxu0 %v476
    %1459 = vmatprep.subr.mxu0 %v479
    %1460 = vmatpush1.msra.mxu0 %v478
    %1461 = vmatprep.subr.mxu0 %v481
    %1462 = vmatpush1.msra.mxu0 %v480
    %1463 = vmatprep.mubr.f32.mxu0 %v903
    %1464 = vmatmul.mubr.f32.gmra.mrb[0].mxu0 %v895
    %v1465 = vpop.f32.mrb[0].mxu0
    %v1466 = vadd.f32 %v1395, %v1465
    %v1467 = vpop.f32.mrb[0].mxu0
    %v1468 = vadd.f32 %v1397, %v1467
    %1469 = vdwg.mxu0
    %1470 = vmatprep.subr.mxu0 %v483
    %1471 = vmatpush1.msra.mxu0 %v482
    %1472 = vmatprep.subr.mxu0 %v485
    %1473 = vmatpush1.msra.mxu0 %v484
    %1474 = vmatprep.subr.mxu0 %v487
    %1475 = vmatpush1.msra.mxu0 %v486
    %1476 = vmatprep.subr.mxu0 %v489
    %1477 = vmatpush1.msra.mxu0 %v488
    %1478 = vmatprep.subr.mxu0 %v491
    %1479 = vmatpush1.msra.mxu0 %v490
    %1480 = vmatprep.subr.mxu0 %v493
    %1481 = vmatpush1.msra.mxu0 %v492
    %1482 = vmatprep.subr.mxu0 %v495
    %1483 = vmatpush1.msra.mxu0 %v494
    %1484 = vmatprep.subr.mxu0 %v497
    %1485 = vmatpush1.msra.mxu0 %v496
    %1486 = vmatprep.subr.mxu0 %v499
    %1487 = vmatpush1.msra.mxu0 %v498
    %1488 = vmatprep.subr.mxu0 %v501
    %1489 = vmatpush1.msra.mxu0 %v500
    %1490 = vmatprep.subr.mxu0 %v503
    %1491 = vmatpush1.msra.mxu0 %v502
    %1492 = vmatprep.subr.mxu0 %v505
    %1493 = vmatpush1.msra.mxu0 %v504
    %1494 = vmatprep.subr.mxu0 %v507
    %1495 = vmatpush1.msra.mxu0 %v506
    %1496 = vmatprep.subr.mxu0 %v509
    %1497 = vmatpush1.msra.mxu0 %v508
    %1498 = vmatprep.subr.mxu0 %v511
    %1499 = vmatpush1.msra.mxu0 %v510
    %1500 = vmatprep.subr.mxu0 %v513
    %1501 = vmatpush1.msra.mxu0 %v512
    %1502 = vmatprep.subr.mxu0 %v515
    %1503 = vmatpush1.msra.mxu0 %v514
    %1504 = vmatprep.subr.mxu0 %v517
    %1505 = vmatpush1.msra.mxu0 %v516
    %1506 = vmatprep.subr.mxu0 %v519
    %1507 = vmatpush1.msra.mxu0 %v518
    %1508 = vmatprep.subr.mxu0 %v521
    %1509 = vmatpush1.msra.mxu0 %v520
    %1510 = vmatprep.subr.mxu0 %v523
    %1511 = vmatpush1.msra.mxu0 %v522
    %1512 = vmatprep.subr.mxu0 %v525
    %1513 = vmatpush1.msra.mxu0 %v524
    %1514 = vmatprep.subr.mxu0 %v527
    %1515 = vmatpush1.msra.mxu0 %v526
    %1516 = vmatprep.subr.mxu0 %v529
    %1517 = vmatpush1.msra.mxu0 %v528
    %1518 = vmatprep.subr.mxu0 %v531
    %1519 = vmatpush1.msra.mxu0 %v530
    %1520 = vmatprep.subr.mxu0 %v533
    %1521 = vmatpush1.msra.mxu0 %v532
    %1522 = vmatprep.subr.mxu0 %v535
    %1523 = vmatpush1.msra.mxu0 %v534
    %1524 = vmatprep.subr.mxu0 %v537
    %1525 = vmatpush1.msra.mxu0 %v536
    %1526 = vmatprep.subr.mxu0 %v539
    %1527 = vmatpush1.msra.mxu0 %v538
    %1528 = vmatprep.subr.mxu0 %v541
    %1529 = vmatpush1.msra.mxu0 %v540
    %1530 = vmatprep.subr.mxu0 %v543
    %1531 = vmatpush1.msra.mxu0 %v542
    %1532 = vmatprep.subr.mxu0 %v545
    %1533 = vmatpush1.msra.mxu0 %v544
    %1534 = vmatprep.mubr.f32.mxu0 %v904
    %1535 = vmatmul.mubr.f32.gmra.mrb[0].mxu0 %v902
    %v1536 = vpop.f32.mrb[0].mxu0
    %v1537 = vadd.f32 %v1466, %v1536
    %v1538 = vpop.f32.mrb[0].mxu0
    %v1539 = vadd.f32 %v1468, %v1538
    %1540 = vdwg.mxu0
    %1541 = vmatprep.subr.mxu0 %v547
    %1542 = vmatpush1.msra.mxu0 %v546
    %1543 = vmatprep.subr.mxu0 %v549
    %1544 = vmatpush1.msra.mxu0 %v548
    %1545 = vmatprep.subr.mxu0 %v551
    %1546 = vmatpush1.msra.mxu0 %v550
    %1547 = vmatprep.subr.mxu0 %v553
    %1548 = vmatpush1.msra.mxu0 %v552
    %1549 = vmatprep.subr.mxu0 %v555
    %1550 = vmatpush1.msra.mxu0 %v554
    %1551 = vmatprep.subr.mxu0 %v557
    %1552 = vmatpush1.msra.mxu0 %v556
    %1553 = vmatprep.subr.mxu0 %v559
    %1554 = vmatpush1.msra.mxu0 %v558
    %1555 = vmatprep.subr.mxu0 %v561
    %1556 = vmatpush1.msra.mxu0 %v560
    %1557 = vmatprep.subr.mxu0 %v563
    %1558 = vmatpush1.msra.mxu0 %v562
    %1559 = vmatprep.subr.mxu0 %v565
    %1560 = vmatpush1.msra.mxu0 %v564
    %1561 = vmatprep.subr.mxu0 %v567
    %1562 = vmatpush1.msra.mxu0 %v566
    %1563 = vmatprep.subr.mxu0 %v569
    %1564 = vmatpush1.msra.mxu0 %v568
    %1565 = vmatprep.subr.mxu0 %v571
    %1566 = vmatpush1.msra.mxu0 %v570
    %1567 = vmatprep.subr.mxu0 %v573
    %1568 = vmatpush1.msra.mxu0 %v572
    %1569 = vmatprep.subr.mxu0 %v575
    %1570 = vmatpush1.msra.mxu0 %v574
    %1571 = vmatprep.subr.mxu0 %v577
    %1572 = vmatpush1.msra.mxu0 %v576
    %1573 = vmatprep.subr.mxu0 %v579
    %1574 = vmatpush1.msra.mxu0 %v578
    %1575 = vmatprep.subr.mxu0 %v581
    %1576 = vmatpush1.msra.mxu0 %v580
    %1577 = vmatprep.subr.mxu0 %v583
    %1578 = vmatpush1.msra.mxu0 %v582
    %1579 = vmatprep.subr.mxu0 %v585
    %1580 = vmatpush1.msra.mxu0 %v584
    %1581 = vmatprep.subr.mxu0 %v587
    %1582 = vmatpush1.msra.mxu0 %v586
    %1583 = vmatprep.subr.mxu0 %v589
    %1584 = vmatpush1.msra.mxu0 %v588
    %1585 = vmatprep.subr.mxu0 %v591
    %1586 = vmatpush1.msra.mxu0 %v590
    %1587 = vmatprep.subr.mxu0 %v593
    %1588 = vmatpush1.msra.mxu0 %v592
    %1589 = vmatprep.subr.mxu0 %v595
    %1590 = vmatpush1.msra.mxu0 %v594
    %1591 = vmatprep.subr.mxu0 %v597
    %1592 = vmatpush1.msra.mxu0 %v596
    %1593 = vmatprep.subr.mxu0 %v599
    %1594 = vmatpush1.msra.mxu0 %v598
    %1595 = vmatprep.subr.mxu0 %v601
    %1596 = vmatpush1.msra.mxu0 %v600
    %1597 = vmatprep.subr.mxu0 %v603
    %1598 = vmatpush1.msra.mxu0 %v602
    %1599 = vmatprep.subr.mxu0 %v605
    %1600 = vmatpush1.msra.mxu0 %v604
    %1601 = vmatprep.subr.mxu0 %v607
    %1602 = vmatpush1.msra.mxu0 %v606
    %1603 = vmatprep.subr.mxu0 %v609
    %1604 = vmatpush1.msra.mxu0 %v608
    %1605 = vmatprep.mubr.f32.mxu0 %v920
    %1606 = vmatmul.mubr.f32.gmra.mrb[0].mxu0 %v912
    %v1607 = vpop.f32.mrb[0].mxu0
    %v1608 = vadd.f32 %v1537, %v1607
    %v1609 = vpop.f32.mrb[0].mxu0
    %v1610 = vadd.f32 %v1539, %v1609
    %1611 = vdwg.mxu0
    %1612 = vmatprep.subr.mxu0 %v611
    %1613 = vmatpush1.msra.mxu0 %v610
    %1614 = vmatprep.subr.mxu0 %v613
    %1615 = vmatpush1.msra.mxu0 %v612
    %1616 = vmatprep.subr.mxu0 %v615
    %1617 = vmatpush1.msra.mxu0 %v614
    %1618 = vmatprep.subr.mxu0 %v617
    %1619 = vmatpush1.msra.mxu0 %v616
    %1620 = vmatprep.subr.mxu0 %v619
    %1621 = vmatpush1.msra.mxu0 %v618
    %1622 = vmatprep.subr.mxu0 %v621
    %1623 = vmatpush1.msra.mxu0 %v620
    %1624 = vmatprep.subr.mxu0 %v623
    %1625 = vmatpush1.msra.mxu0 %v622
    %1626 = vmatprep.subr.mxu0 %v625
    %1627 = vmatpush1.msra.mxu0 %v624
    %1628 = vmatprep.subr.mxu0 %v627
    %1629 = vmatpush1.msra.mxu0 %v626
    %1630 = vmatprep.subr.mxu0 %v629
    %1631 = vmatpush1.msra.mxu0 %v628
    %1632 = vmatprep.subr.mxu0 %v631
    %1633 = vmatpush1.msra.mxu0 %v630
    %1634 = vmatprep.subr.mxu0 %v633
    %1635 = vmatpush1.msra.mxu0 %v632
    %1636 = vmatprep.subr.mxu0 %v635
    %1637 = vmatpush1.msra.mxu0 %v634
    %1638 = vmatprep.subr.mxu0 %v637
    %1639 = vmatpush1.msra.mxu0 %v636
    %1640 = vmatprep.subr.mxu0 %v639
    %1641 = vmatpush1.msra.mxu0 %v638
    %1642 = vmatprep.subr.mxu0 %v641
    %1643 = vmatpush1.msra.mxu0 %v640
    %1644 = vmatprep.subr.mxu0 %v643
    %1645 = vmatpush1.msra.mxu0 %v642
    %1646 = vmatprep.subr.mxu0 %v645
    %1647 = vmatpush1.msra.mxu0 %v644
    %1648 = vmatprep.subr.mxu0 %v647
    %1649 = vmatpush1.msra.mxu0 %v646
    %1650 = vmatprep.subr.mxu0 %v649
    %1651 = vmatpush1.msra.mxu0 %v648
    %1652 = vmatprep.subr.mxu0 %v651
    %1653 = vmatpush1.msra.mxu0 %v650
    %1654 = vmatprep.subr.mxu0 %v653
    %1655 = vmatpush1.msra.mxu0 %v652
    %1656 = vmatprep.subr.mxu0 %v655
    %1657 = vmatpush1.msra.mxu0 %v654
    %1658 = vmatprep.subr.mxu0 %v657
    %1659 = vmatpush1.msra.mxu0 %v656
    %1660 = vmatprep.subr.mxu0 %v659
    %1661 = vmatpush1.msra.mxu0 %v658
    %1662 = vmatprep.subr.mxu0 %v661
    %1663 = vmatpush1.msra.mxu0 %v660
    %1664 = vmatprep.subr.mxu0 %v663
    %1665 = vmatpush1.msra.mxu0 %v662
    %1666 = vmatprep.subr.mxu0 %v665
    %1667 = vmatpush1.msra.mxu0 %v664
    %1668 = vmatprep.subr.mxu0 %v667
    %1669 = vmatpush1.msra.mxu0 %v666
    %1670 = vmatprep.subr.mxu0 %v669
    %1671 = vmatpush1.msra.mxu0 %v668
    %1672 = vmatprep.subr.mxu0 %v671
    %1673 = vmatpush1.msra.mxu0 %v670
    %1674 = vmatprep.subr.mxu0 %v673
    %1675 = vmatpush1.msra.mxu0 %v672
    %1676 = vmatprep.mubr.f32.mxu0 %v921
    %1677 = vmatmul.mubr.f32.gmra.mrb[0].mxu0 %v919
    %v1678 = vpop.f32.mrb[0].mxu0
    %v1679 = vadd.f32 %v1608, %v1678
    %v1680 = vpop.f32.mrb[0].mxu0
    %v1681 = vadd.f32 %v1610, %v1680
    %1682 = vdwg.mxu0
    %1683 = vmatprep.subr.mxu0 %v675
    %1684 = vmatpush1.msra.mxu0 %v674
    %1685 = vmatprep.subr.mxu0 %v677
    %1686 = vmatpush1.msra.mxu0 %v676
    %1687 = vmatprep.subr.mxu0 %v679
    %1688 = vmatpush1.msra.mxu0 %v678
    %1689 = vmatprep.subr.mxu0 %v681
    %1690 = vmatpush1.msra.mxu0 %v680
    %1691 = vmatprep.subr.mxu0 %v683
    %1692 = vmatpush1.msra.mxu0 %v682
    %1693 = vmatprep.subr.mxu0 %v685
    %1694 = vmatpush1.msra.mxu0 %v684
    %1695 = vmatprep.subr.mxu0 %v687
    %1696 = vmatpush1.msra.mxu0 %v686
    %1697 = vmatprep.subr.mxu0 %v689
    %1698 = vmatpush1.msra.mxu0 %v688
    %1699 = vmatprep.subr.mxu0 %v691
    %1700 = vmatpush1.msra.mxu0 %v690
    %1701 = vmatprep.subr.mxu0 %v693
    %1702 = vmatpush1.msra.mxu0 %v692
    %1703 = vmatprep.subr.mxu0 %v695
    %1704 = vmatpush1.msra.mxu0 %v694
    %1705 = vmatprep.subr.mxu0 %v697
    %1706 = vmatpush1.msra.mxu0 %v696
    %1707 = vmatprep.subr.mxu0 %v699
    %1708 = vmatpush1.msra.mxu0 %v698
    %1709 = vmatprep.subr.mxu0 %v701
    %1710 = vmatpush1.msra.mxu0 %v700
    %1711 = vmatprep.subr.mxu0 %v703
    %1712 = vmatpush1.msra.mxu0 %v702
    %1713 = vmatprep.subr.mxu0 %v705
    %1714 = vmatpush1.msra.mxu0 %v704
    %1715 = vmatprep.subr.mxu0 %v707
    %1716 = vmatpush1.msra.mxu0 %v706
    %1717 = vmatprep.subr.mxu0 %v709
    %1718 = vmatpush1.msra.mxu0 %v708
    %1719 = vmatprep.subr.mxu0 %v711
    %1720 = vmatpush1.msra.mxu0 %v710
    %1721 = vmatprep.subr.mxu0 %v713
    %1722 = vmatpush1.msra.mxu0 %v712
    %1723 = vmatprep.subr.mxu0 %v715
    %1724 = vmatpush1.msra.mxu0 %v714
    %1725 = vmatprep.subr.mxu0 %v717
    %1726 = vmatpush1.msra.mxu0 %v716
    %1727 = vmatprep.subr.mxu0 %v719
    %1728 = vmatpush1.msra.mxu0 %v718
    %1729 = vmatprep.subr.mxu0 %v721
    %1730 = vmatpush1.msra.mxu0 %v720
    %1731 = vmatprep.subr.mxu0 %v723
    %1732 = vmatpush1.msra.mxu0 %v722
    %1733 = vmatprep.subr.mxu0 %v725
    %1734 = vmatpush1.msra.mxu0 %v724
    %1735 = vmatprep.subr.mxu0 %v727
    %1736 = vmatpush1.msra.mxu0 %v726
    %1737 = vmatprep.subr.mxu0 %v729
    %1738 = vmatpush1.msra.mxu0 %v728
    %1739 = vmatprep.subr.mxu0 %v731
    %1740 = vmatpush1.msra.mxu0 %v730
    %1741 = vmatprep.subr.mxu0 %v733
    %1742 = vmatpush1.msra.mxu0 %v732
    %1743 = vmatprep.subr.mxu0 %v735
    %1744 = vmatpush1.msra.mxu0 %v734
    %1745 = vmatprep.subr.mxu0 %v737
    %1746 = vmatpush1.msra.mxu0 %v736
    %1747 = vmatprep.mubr.f32.mxu0 %v937
    %1748 = vmatmul.mubr.f32.gmra.mrb[0].mxu0 %v929
    %v1749 = vpop.f32.mrb[0].mxu0
    %v1750 = vadd.f32 %v1679, %v1749
    %v1751 = vpop.f32.mrb[0].mxu0
    %v1752 = vadd.f32 %v1681, %v1751
    %1753 = vdwg.mxu0
    %1754 = vmatprep.subr.mxu0 %v739
    %1755 = vmatpush1.msra.mxu0 %v738
    %1756 = vmatprep.subr.mxu0 %v741
    %1757 = vmatpush1.msra.mxu0 %v740
    %1758 = vmatprep.subr.mxu0 %v743
    %1759 = vmatpush1.msra.mxu0 %v742
    %1760 = vmatprep.subr.mxu0 %v745
    %1761 = vmatpush1.msra.mxu0 %v744
    %1762 = vmatprep.subr.mxu0 %v747
    %1763 = vmatpush1.msra.mxu0 %v746
    %1764 = vmatprep.subr.mxu0 %v749
    %1765 = vmatpush1.msra.mxu0 %v748
    %1766 = vmatprep.subr.mxu0 %v751
    %1767 = vmatpush1.msra.mxu0 %v750
    %1768 = vmatprep.subr.mxu0 %v753
    %1769 = vmatpush1.msra.mxu0 %v752
    %1770 = vmatprep.subr.mxu0 %v755
    %1771 = vmatpush1.msra.mxu0 %v754
    %1772 = vmatprep.subr.mxu0 %v757
    %1773 = vmatpush1.msra.mxu0 %v756
    %1774 = vmatprep.subr.mxu0 %v759
    %1775 = vmatpush1.msra.mxu0 %v758
    %1776 = vmatprep.subr.mxu0 %v761
    %1777 = vmatpush1.msra.mxu0 %v760
    %1778 = vmatprep.subr.mxu0 %v763
    %1779 = vmatpush1.msra.mxu0 %v762
    %1780 = vmatprep.subr.mxu0 %v765
    %1781 = vmatpush1.msra.mxu0 %v764
    %1782 = vmatprep.subr.mxu0 %v767
    %1783 = vmatpush1.msra.mxu0 %v766
    %1784 = vmatprep.subr.mxu0 %v769
    %1785 = vmatpush1.msra.mxu0 %v768
    %1786 = vmatprep.subr.mxu0 %v771
    %1787 = vmatpush1.msra.mxu0 %v770
    %1788 = vmatprep.subr.mxu0 %v773
    %1789 = vmatpush1.msra.mxu0 %v772
    %1790 = vmatprep.subr.mxu0 %v775
    %1791 = vmatpush1.msra.mxu0 %v774
    %1792 = vmatprep.subr.mxu0 %v777
    %1793 = vmatpush1.msra.mxu0 %v776
    %1794 = vmatprep.subr.mxu0 %v779
    %1795 = vmatpush1.msra.mxu0 %v778
    %1796 = vmatprep.subr.mxu0 %v781
    %1797 = vmatpush1.msra.mxu0 %v780
    %1798 = vmatprep.subr.mxu0 %v783
    %1799 = vmatpush1.msra.mxu0 %v782
    %1800 = vmatprep.subr.mxu0 %v785
    %1801 = vmatpush1.msra.mxu0 %v784
    %1802 = vmatprep.subr.mxu0 %v787
    %1803 = vmatpush1.msra.mxu0 %v786
    %1804 = vmatprep.subr.mxu0 %v789
    %1805 = vmatpush1.msra.mxu0 %v788
    %1806 = vmatprep.subr.mxu0 %v791
    %1807 = vmatpush1.msra.mxu0 %v790
    %1808 = vmatprep.subr.mxu0 %v793
    %1809 = vmatpush1.msra.mxu0 %v792
    %1810 = vmatprep.subr.mxu0 %v795
    %1811 = vmatpush1.msra.mxu0 %v794
    %1812 = vmatprep.subr.mxu0 %v797
    %1813 = vmatpush1.msra.mxu0 %v796
    %1814 = vmatprep.subr.mxu0 %v799
    %1815 = vmatpush1.msra.mxu0 %v798
    %1816 = vmatprep.subr.mxu0 %v801
    %1817 = vmatpush1.msra.mxu0 %v800
    %1818 = vmatprep.mubr.f32.mxu0 %v938
    %1819 = vmatmul.mubr.f32.gmra.mrb[0].mxu0 %v936
    %v1820 = vpop.f32.mrb[0].mxu0
    %v1821 = vadd.f32 %v1750, %v1820
    %v1822 = vpop.f32.mrb[0].mxu0
    %v1823 = vadd.f32 %v1752, %v1822
    %1824 = vdwg.mxu0
    %1825 = vmatprep.subr.mxu0 %v803
    %1826 = vmatpush1.msra.mxu0 %v802
    %1827 = vmatprep.subr.mxu0 %v805
    %1828 = vmatpush1.msra.mxu0 %v804
    %1829 = vmatprep.subr.mxu0 %v807
    %1830 = vmatpush1.msra.mxu0 %v806
    %1831 = vmatprep.subr.mxu0 %v809
    %1832 = vmatpush1.msra.mxu0 %v808
    %1833 = vmatprep.subr.mxu0 %v811
    %1834 = vmatpush1.msra.mxu0 %v810
    %1835 = vmatprep.subr.mxu0 %v813
    %1836 = vmatpush1.msra.mxu0 %v812
    %1837 = vmatprep.subr.mxu0 %v815
    %1838 = vmatpush1.msra.mxu0 %v814
    %1839 = vmatprep.subr.mxu0 %v817
    %1840 = vmatpush1.msra.mxu0 %v816
    %1841 = vmatprep.subr.mxu0 0.0
    %1842 = vmatpush1.msra.mxu0 0.0
    %1843 = vmatprep.subr.mxu0 0.0
    %1844 = vmatpush1.msra.mxu0 0.0
    %1845 = vmatprep.subr.mxu0 0.0
    %1846 = vmatpush1.msra.mxu0 0.0
    %1847 = vmatprep.subr.mxu0 0.0
    %1848 = vmatpush1.msra.mxu0 0.0
    %1849 = vmatprep.subr.mxu0 0.0
    %1850 = vmatpush1.msra.mxu0 0.0
    %1851 = vmatprep.subr.mxu0 0.0
    %1852 = vmatpush1.msra.mxu0 0.0
    %1853 = vmatprep.subr.mxu0 0.0
    %1854 = vmatpush1.msra.mxu0 0.0
    %1855 = vmatprep.subr.mxu0 0.0
    %1856 = vmatpush1.msra.mxu0 0.0
    %1857 = vmatprep.subr.mxu0 0.0
    %1858 = vmatpush1.msra.mxu0 0.0
    %1859 = vmatprep.subr.mxu0 0.0
    %1860 = vmatpush1.msra.mxu0 0.0
    %1861 = vmatprep.subr.mxu0 0.0
    %1862 = vmatpush1.msra.mxu0 0.0
    %1863 = vmatprep.subr.mxu0 0.0
    %1864 = vmatpush1.msra.mxu0 0.0
    %1865 = vmatprep.subr.mxu0 0.0
    %1866 = vmatpush1.msra.mxu0 0.0
    %1867 = vmatprep.subr.mxu0 0.0
    %1868 = vmatpush1.msra.mxu0 0.0
    %1869 = vmatprep.subr.mxu0 0.0
    %1870 = vmatpush1.msra.mxu0 0.0
    %1871 = vmatprep.subr.mxu0 0.0
    %1872 = vmatpush1.msra.mxu0 0.0
    %1873 = vmatprep.subr.mxu0 0.0
    %1874 = vmatpush1.msra.mxu0 0.0
    %1875 = vmatprep.subr.mxu0 0.0
    %1876 = vmatpush1.msra.mxu0 0.0
    %1877 = vmatprep.subr.mxu0 0.0
    %1878 = vmatpush1.msra.mxu0 0.0
    %1879 = vmatprep.subr.mxu0 0.0
    %1880 = vmatpush1.msra.mxu0 0.0
    %1881 = vmatprep.subr.mxu0 0.0
    %1882 = vmatpush1.msra.mxu0 0.0
    %1883 = vmatprep.subr.mxu0 0.0
    %1884 = vmatpush1.msra.mxu0 0.0
    %1885 = vmatprep.subr.mxu0 0.0
    %1886 = vmatpush1.msra.mxu0 0.0
    %1887 = vmatprep.subr.mxu0 0.0
    %1888 = vmatpush1.msra.mxu0 0.0
    %1889 = vmatprep.mubr.f32.mxu0 0.0
    %1890 = vmatmul.mubr.f32.gmra.mrb[0].mxu0 %v971
    %v1891 = vpop.f32.mrb[0].mxu0
    %v1892 = vadd.f32 %v1821, %v1891
    %v1893 = vpop.f32.mrb[0].mxu0
    %v1894 = vadd.f32 %v1823, %v1893
    %1895 = vdwg.mxu0
    %v1896 = vmul.f32 %v1892, %v1892
    %v1897 = vmul.f32 %v1894, %v1894
    %v1898 = vld [vmem:[%s3] sm:$0xff]
    %v1899 = vld [vmem:[%s3 + $0x8] sm:$0xff]
    %v1900 = vld [vmem:[%s3 + $0x10] sm:$0xff]
    %v1901 = vld [vmem:[%s3 + $0x18] sm:$0xff]
    %v1902 = vld [vmem:[%s3 + $0x20] sm:$0xff]
    %v1903 = vld [vmem:[%s3 + $0x28] sm:$0xff]
    %v1904 = vld [vmem:[%s3 + $0x30] sm:$0xff]
    %v1905 = vld [vmem:[%s3 + $0x38] sm:$0xff]
    %v1906 = vld [vmem:[%s3 + $0x40] sm:$0xff]
    %v1907 = vld [vmem:[%s3 + $0x48] sm:$0xff]
    %v1908 = vld [vmem:[%s3 + $0x50] sm:$0xff]
    %v1909 = vld [vmem:[%s3 + $0x58] sm:$0xff]
    %v1910 = vld [vmem:[%s3 + $0x60] sm:$0xff]
    %v1911 = vld [vmem:[%s3 + $0x68] sm:$0xff]
    %v1912 = vld [vmem:[%s3 + $0x70] sm:$0xff]
    %v1913 = vld [vmem:[%s3 + $0x78] sm:$0xff]
    %v1914 = vld [vmem:[%s3 + $0x80] sm:$0xff]
    %v1915 = vld [vmem:[%s3 + $0x88] sm:$0xff]
    %v1916 = vld [vmem:[%s3 + $0x90] sm:$0xff]
    %v1917 = vld [vmem:[%s3 + $0x98] sm:$0xff]
    %v1918 = vld [vmem:[%s3 + $0xa0] sm:$0xff]
    %v1919 = vld [vmem:[%s3 + $0xa8] sm:$0xff]
    %v1920 = vld [vmem:[%s3 + $0xb0] sm:$0xff]
    %v1921 = vld [vmem:[%s3 + $0xb8] sm:$0xff]
    %v1922 = vld [vmem:[%s3 + $0xc0] sm:$0xff]
    %v1923 = vld [vmem:[%s3 + $0xc8] sm:$0xff]
    %v1924 = vld [vmem:[%s3 + $0xd0] sm:$0xff]
    %v1925 = vld [vmem:[%s3 + $0xd8] sm:$0xff]
    %v1926 = vld [vmem:[%s3 + $0xe0] sm:$0xff]
    %v1927 = vld [vmem:[%s3 + $0xe8] sm:$0xff]
    %v1928 = vld [vmem:[%s3 + $0xf0] sm:$0xff]
    %v1929 = vld [vmem:[%s3 + $0xf8] sm:$0xff]
    %v1930 = vld [vmem:[%s4] sm:$0x1]
    %v1932 = vlaneseq
    %v1933 = vshrl.u32 %v1932, 7
    %v1934 = vsub.s32 0, %v1933
    %v1935 = vrot.slane %v1930, %v1934
    %1937 = vmatprep.subr.mxu0 0.0
    %1938 = vmatpush1.msra.mxu0 %v1898
    %1939 = vmatprep.subr.mxu0 0.0
    %1940 = vmatpush1.msra.mxu0 %v1899
    %1941 = vmatprep.subr.mxu0 0.0
    %1942 = vmatpush1.msra.mxu0 %v1900
    %1943 = vmatprep.subr.mxu0 0.0
    %1944 = vmatpush1.msra.mxu0 %v1901
    %1945 = vmatprep.subr.mxu0 0.0
    %1946 = vmatpush1.msra.mxu0 %v1902
    %1947 = vmatprep.subr.mxu0 0.0
    %1948 = vmatpush1.msra.mxu0 %v1903
    %1949 = vmatprep.subr.mxu0 0.0
    %1950 = vmatpush1.msra.mxu0 %v1904
    %1951 = vmatprep.subr.mxu0 0.0
    %1952 = vmatpush1.msra.mxu0 %v1905
    %1953 = vmatprep.subr.mxu0 0.0
    %1954 = vmatpush1.msra.mxu0 %v1906
    %1955 = vmatprep.subr.mxu0 0.0
    %1956 = vmatpush1.msra.mxu0 %v1907
    %1957 = vmatprep.subr.mxu0 0.0
    %1958 = vmatpush1.msra.mxu0 %v1908
    %1959 = vmatprep.subr.mxu0 0.0
    %1960 = vmatpush1.msra.mxu0 %v1909
    %1961 = vmatprep.subr.mxu0 0.0
    %1962 = vmatpush1.msra.mxu0 %v1910
    %1963 = vmatprep.subr.mxu0 0.0
    %1964 = vmatpush1.msra.mxu0 %v1911
    %1965 = vmatprep.subr.mxu0 0.0
    %1966 = vmatpush1.msra.mxu0 %v1912
    %1967 = vmatprep.subr.mxu0 0.0
    %1968 = vmatpush1.msra.mxu0 %v1913
    %1969 = vmatprep.subr.mxu0 0.0
    %1970 = vmatpush1.msra.mxu0 %v1914
    %1971 = vmatprep.subr.mxu0 0.0
    %1972 = vmatpush1.msra.mxu0 %v1915
    %1973 = vmatprep.subr.mxu0 0.0
    %1974 = vmatpush1.msra.mxu0 %v1916
    %1975 = vmatprep.subr.mxu0 0.0
    %1976 = vmatpush1.msra.mxu0 %v1917
    %1977 = vmatprep.subr.mxu0 0.0
    %1978 = vmatpush1.msra.mxu0 %v1918
    %1979 = vmatprep.subr.mxu0 0.0
    %1980 = vmatpush1.msra.mxu0 %v1919
    %1981 = vmatprep.subr.mxu0 0.0
    %1982 = vmatpush1.msra.mxu0 %v1920
    %1983 = vmatprep.subr.mxu0 0.0
    %1984 = vmatpush1.msra.mxu0 %v1921
    %1985 = vmatprep.subr.mxu0 0.0
    %1986 = vmatpush1.msra.mxu0 %v1922
    %1987 = vmatprep.subr.mxu0 0.0
    %1988 = vmatpush1.msra.mxu0 %v1923
    %1989 = vmatprep.subr.mxu0 0.0
    %1990 = vmatpush1.msra.mxu0 %v1924
    %1991 = vmatprep.subr.mxu0 0.0
    %1992 = vmatpush1.msra.mxu0 %v1925
    %1993 = vmatprep.subr.mxu0 0.0
    %1994 = vmatpush1.msra.mxu0 %v1926
    %1995 = vmatprep.subr.mxu0 0.0
    %1996 = vmatpush1.msra.mxu0 %v1927
    %1997 = vmatprep.subr.mxu0 0.0
    %1998 = vmatpush1.msra.mxu0 %v1928
    %1999 = vmatprep.subr.mxu0 0.0
    %2000 = vmatpush1.msra.mxu0 %v1929
    %2001 = vmatprep.mubr.f32.mxu0 %v1897
    %2002 = vmatmul.mubr.f32.gmra.mrb[0].mxu0 %v1896
    %v2003 = vpop.f32.mrb[0].mxu0
    %v2004 = vadd.f32 %v1935, %v2003
    %v2005 = vpop.f32.mrb[0].mxu0
    %2006 = vdwg.mxu0
    %v2007 = vmax.f32 %v2004, 0.0
    %v2008 = vld [vmem:[%s5] sm:$0xff]
    %v2009 = vld [vmem:[%s5 + $0x8] sm:$0xff]
    %v2010 = vld [vmem:[%s5 + $0x10] sm:$0xff]
    %v2011 = vld [vmem:[%s5 + $0x18] sm:$0xff]
    %v2012 = vld [vmem:[%s5 + $0x20] sm:$0xff]
    %v2013 = vld [vmem:[%s5 + $0x28] sm:$0xff]
    %v2014 = vld [vmem:[%s5 + $0x30] sm:$0xff]
    %v2015 = vld [vmem:[%s5 + $0x38] sm:$0xff]
    %v2016 = vld [vmem:[%s6] sm:$0x1]
    %v2018 = vlaneseq
    %v2019 = vshrl.u32 %v2018, 7
    %v2020 = vsub.s32 0, %v2019
    %v2021 = vrot.slane %v2016, %v2020
    %v2024 = vsel %vm970, %v2007, 0
    %2026 = vmatprep.subr.mxu0 0.0
    %2027 = vmatpush1.msra.mxu0 %v2008
    %2028 = vmatprep.subr.mxu0 0.0
    %2029 = vmatpush1.msra.mxu0 %v2009
    %2030 = vmatprep.subr.mxu0 0.0
    %2031 = vmatpush1.msra.mxu0 %v2010
    %2032 = vmatprep.subr.mxu0 0.0
    %2033 = vmatpush1.msra.mxu0 %v2011
    %2034 = vmatprep.subr.mxu0 0.0
    %2035 = vmatpush1.msra.mxu0 %v2012
    %2036 = vmatprep.subr.mxu0 0.0
    %2037 = vmatpush1.msra.mxu0 %v2013
    %2038 = vmatprep.subr.mxu0 0.0
    %2039 = vmatpush1.msra.mxu0 %v2014
    %2040 = vmatprep.subr.mxu0 0.0
    %2041 = vmatpush1.msra.mxu0 %v2015
    %2042 = vmatprep.subr.mxu0 0.0
    %2043 = vmatpush1.msra.mxu0 0.0
    %2044 = vmatprep.subr.mxu0 0.0
    %2045 = vmatpush1.msra.mxu0 0.0
    %2046 = vmatprep.subr.mxu0 0.0
    %2047 = vmatpush1.msra.mxu0 0.0
    %2048 = vmatprep.subr.mxu0 0.0
    %2049 = vmatpush1.msra.mxu0 0.0
    %2050 = vmatprep.subr.mxu0 0.0
    %2051 = vmatpush1.msra.mxu0 0.0
    %2052 = vmatprep.subr.mxu0 0.0
    %2053 = vmatpush1.msra.mxu0 0.0
    %2054 = vmatprep.subr.mxu0 0.0
    %2055 = vmatpush1.msra.mxu0 0.0
    %2056 = vmatprep.subr.mxu0 0.0
    %2057 = vmatpush1.msra.mxu0 0.0
    %2058 = vmatprep.subr.mxu0 0.0
    %2059 = vmatpush1.msra.mxu0 0.0
    %2060 = vmatprep.subr.mxu0 0.0
    %2061 = vmatpush1.msra.mxu0 0.0
    %2062 = vmatprep.subr.mxu0 0.0
    %2063 = vmatpush1.msra.mxu0 0.0
    %2064 = vmatprep.subr.mxu0 0.0
    %2065 = vmatpush1.msra.mxu0 0.0
    %2066 = vmatprep.subr.mxu0 0.0
    %2067 = vmatpush1.msra.mxu0 0.0
    %2068 = vmatprep.subr.mxu0 0.0
    %2069 = vmatpush1.msra.mxu0 0.0
    %2070 = vmatprep.subr.mxu0 0.0
    %2071 = vmatpush1.msra.mxu0 0.0
    %2072 = vmatprep.subr.mxu0 0.0
    %2073 = vmatpush1.msra.mxu0 0.0
    %2074 = vmatprep.subr.mxu0 0.0
    %2075 = vmatpush1.msra.mxu0 0.0
    %2076 = vmatprep.subr.mxu0 0.0
    %2077 = vmatpush1.msra.mxu0 0.0
    %2078 = vmatprep.subr.mxu0 0.0
    %2079 = vmatpush1.msra.mxu0 0.0
    %2080 = vmatprep.subr.mxu0 0.0
    %2081 = vmatpush1.msra.mxu0 0.0
    %2082 = vmatprep.subr.mxu0 0.0
    %2083 = vmatpush1.msra.mxu0 0.0
    %2084 = vmatprep.subr.mxu0 0.0
    %2085 = vmatpush1.msra.mxu0 0.0
    %2086 = vmatprep.subr.mxu0 0.0
    %2087 = vmatpush1.msra.mxu0 0.0
    %2088 = vmatprep.subr.mxu0 0.0
    %2089 = vmatpush1.msra.mxu0 0.0
    %2090 = vmatprep.mubr.f32.mxu0 0.0
    %2091 = vmatmul.mubr.f32.gmra.mrb[0].mxu0 %v2024
    %v2092 = vpop.f32.mrb[0].mxu0
    %v2093 = vadd.f32 %v2021, %v2092
    %v2094 = vpop.f32.mrb[0].mxu0
    %2095 = vdwg.mxu0
    %2096 = vst [vmem:[#allocation2] sm:$0x3] %v2093
    // Predicated region
    $region30: #{convnet_forward.1} parent=1 // pred_check
      _
    $region31: #{convnet_forward.1} parent=1 // pred_check_branch
      %2098 = sbr.rel (0) target = $region33
    $region32: #{convnet_forward.1} parent=1 // pred_region
      %s2100 = ssub.s32 32, 32
      %2101 = vsyncadd [#allocation3], %s2100
      %s2103 = sshll.u32 [#allocation2], 4
      %s2104 = int_to_ptr.vmem [resolvable:$true] %s2103
      %2106 = dma.vmem_to_hbm [thread:$0]  %s2104, 32, %s7, [#allocation3]
    $region33: #{convnet_forward.1} parent=1 // pred_fallthru
      _
    // Predicated region
    $region34: #{convnet_forward.1} parent=1 // pred_check
      _
    $region35: #{convnet_forward.1} parent=1 // pred_check_branch
      %2108 = sbr.rel (0) target = $region37
    $region36: #{convnet_forward.1} parent=1 // pred_region
      %2109 = dma.done [#allocation3], 32
    $region37: #{convnet_forward.1} parent=1 // pred_fallthru
      _
    %2110 = vsyncpa [#allocation3], 1

</llo_original>
